<compile_context>
chip_gen: v7x
topology: tpu7x:2x2x1
jax: 0.10.0
libtpu: 0.0.40
codegen_flags: <defaults>
</compile_context>

<pallas_src>
import functools

import jax
import jax.numpy as jnp
from jax.experimental import pallas as pl
from jax.experimental.pallas import tpu as pltpu  # noqa: F401  (TPU backend assumed)

# ----------------------------- configuration ------------------------------
B = 2                 # batch size
NPOINT = 16           # number of 3D keypoints
NUM_FILTERS = 32      # image feature channels C (query_dims[0])
GRAPH_FEAT_DIM = 8    # graph feature dim from previous stage
H = W = 16            # high-res image feature spatial size
LOCAL_K = 2           # Index2Feat kernel_size
EMBED_DIM = NUM_FILTERS // 4        # embed_dim = query_dims[0] // 4
QUERY_DIMS = (NUM_FILTERS, 32, 16)  # MLP_QueryNet feat_dims
GRAPH_K = 4           # kNN neighbours
NUM_GRAPH = 2         # num_graph_module
LEAKY_SLOPE = 0.01
GRAPH_LEAKY_SLOPE = 0.2

BN = B * NPOINT                          # kernel rows (b, n) = 32
KKC = LOCAL_K * LOCAL_K * NUM_FILTERS    # 128: one sub-pixel patch, lanes (ky, kx, c)
COLS_LANES = 4 * KKC                     # 512: lanes (sub-pixel, ky, kx, c)
OUT_LANES = 128                          # lane-dense output slab width

# --- wpack (bf16) row offsets; every offset is a multiple of 16 (bf16 sublane pack) ---
OFF_WFOLD = 0                                    # (512, C) folded conv @ pg_w1a
OFF_GMAT = OFF_WFOLD + COLS_LANES                # 512
GMAT_ROWS = GRAPH_K * BN                         # 128
OFF_W1B = OFF_GMAT + GMAT_ROWS                   # 640  (graph-feat half of pg Linear 1)
OFF_PGW2 = OFF_W1B + 16                          # 656  (w1b padded 8 -> 16 rows)
OFF_G = OFF_PGW2 + NUM_FILTERS                   # 688  (per block: Wa then Wb-Wa)
OFF_Q1 = OFF_G + 2 * NUM_FILTERS * NUM_GRAPH     # 816
OFF_Q2 = OFF_Q1 + NUM_FILTERS                    # 848
OFF_Q3 = OFF_Q2 + NUM_FILTERS                    # 880
WPACK_ROWS = OFF_Q3 + NUM_FILTERS                # 912


def _lrelu(x, slope):
    return jnp.where(x > 0, x, slope * x)


# ------------------------------ fused Pallas kernel -----------------------------
def fused_refine_kernel(cols_ref, dyn_ref, wpack_ref, bpack_ref, out_ref, *,
                        k, num_graph, slope, gslope):
    f32, bf16 = jnp.float32, jnp.bfloat16
    C = NUM_FILTERS

    bias = bpack_ref[...]                                   # (8, C) f32
    dyn = dyn_ref[...]                                      # (BN, GD+1) f32
    gfeat = dyn[:, 0:GRAPH_FEAT_DIM].astype(bf16)           # (BN, GD)
    roi = dyn[:, GRAPH_FEAT_DIM:GRAPH_FEAT_DIM + 1]         # (BN, 1)

    # Index2Feat conv (+bias), RoI mask, and the local half of the first pre_graph
    # Linear, folded into one matmul:  roi * (cols @ (Wconv @ W1a) + b_conv @ W1a)
    h_loc = jnp.dot(cols_ref[...],
                    wpack_ref[OFF_WFOLD:OFF_WFOLD + COLS_LANES, :],
                    preferred_element_type=f32)              # (BN, C)
    h = roi * (h_loc + bias[0:1, :])
    h = h + jnp.dot(gfeat, wpack_ref[OFF_W1B:OFF_W1B + GRAPH_FEAT_DIM, :],
                    preferred_element_type=f32) + bias[1:2, :]
    h = _lrelu(h, slope)
    x = jnp.dot(h.astype(bf16), wpack_ref[OFF_PGW2:OFF_PGW2 + C, :],
                preferred_element_type=f32) + bias[2:3, :]
    x = _lrelu(x, slope)                                     # (BN, C) f32

    # StaticGraph blocks:  lrelu(max_j((nbr_j - x)@Wa + x@Wb + shift))
    #                    = lrelu(max_j(nbr_j@Wa) + x@(Wb - Wa) + shift)
    # with the one-hot kNN gather reassociated as gmat @ (x @ Wa).
    gmat = wpack_ref[OFF_GMAT:OFF_GMAT + GMAT_ROWS, :]       # (k*BN, BN) bf16 one-hot
    bn = x.shape[0]
    for i in range(num_graph):
        wa = wpack_ref[OFF_G + 2 * C * i:OFF_G + 2 * C * i + C, :]
        wcb = wpack_ref[OFF_G + 2 * C * i + C:OFF_G + 2 * C * (i + 1), :]
        xb = x.astype(bf16)
        xw = jnp.dot(xb, wa, preferred_element_type=f32)                 # (BN, C)
        base = jnp.dot(xb, wcb, preferred_element_type=f32) + bias[3 + i:4 + i, :]
        nbrw = jnp.dot(gmat, xw.astype(bf16), preferred_element_type=f32)  # (k*BN, C)
        m = nbrw[0:bn, :]
        for j in range(1, k):                                 # k static & tiny -> unrolled
            m = jnp.maximum(m, nbrw[j * bn:(j + 1) * bn, :])
        x = _lrelu(m + base, gslope)                          # (BN, C)

    # MLP_QueryNet (weights zero-padded to 32 lanes end-to-end; padding stays exactly 0).
    q = _lrelu(jnp.dot(x.astype(bf16), wpack_ref[OFF_Q1:OFF_Q1 + C, :],
                       preferred_element_type=f32) + bias[5:6, :], slope)
    q = _lrelu(jnp.dot(q.astype(bf16), wpack_ref[OFF_Q2:OFF_Q2 + C, :],
                       preferred_element_type=f32) + bias[6:7, :], slope)
    bits = jnp.dot(q.astype(bf16), wpack_ref[OFF_Q3:OFF_Q3 + C, :],
                   preferred_element_type=f32) + bias[7:8, :]  # (BN, C); lanes 0:2 live

    # single lane-dense store: [feat (32) | bits (32, lanes 0:2 live) | zeros (64)]
    out_ref[...] = jnp.concatenate(
        [x, bits, jnp.zeros((bn, OUT_LANES - 2 * C), f32)], axis=1)


def fused_refine_call(cols, dyn, wpack, bpack):
    kernel = functools.partial(fused_refine_kernel, k=GRAPH_K, num_graph=NUM_GRAPH,
                               slope=LEAKY_SLOPE, gslope=GRAPH_LEAKY_SLOPE)
    cost = pl.CostEstimate(flops=2_200_000, transcendentals=0, bytes_accessed=110_000)
    return pl.pallas_call(
        kernel,
        out_shape=jax.ShapeDtypeStruct((BN, OUT_LANES), jnp.float32),
        cost_estimate=cost,
    )(cols, dyn, wpack, bpack)


# --------------------------------- JAX glue --------------------------------
def knn_indices(p3d, k):
    # p3d: (1, 3, N); matches `knn()` in the reference (topk of -squared dist)
    inner = -2.0 * jnp.einsum("bdi,bdj->bij", p3d, p3d)
    xx = jnp.sum(p3d ** 2, axis=1, keepdims=True)
    pd = -xx - inner - jnp.swapaxes(xx, 1, 2)
    return jax.lax.top_k(pd, k)[1]  # (1, N, k)


def gather_patch_cols(img_feat, x_id, y_id, K):
    """Gather KxK input patches for the 4 sub-pixel conv outputs per keypoint.

    Returns (B*N, 4*K*K*C) rows ordered (b, n), lanes ordered (sub-pixel, ky, kx, c)
    -- exactly the W_FOLD row order, so no post-gather transpose is needed.
    """
    Bs, C, Hs, Ws = img_feat.shape
    N = x_id.shape[1]
    P = K - 1
    Hp, Wp = Hs + 2 * P, Ws + 2 * P
    xp = jnp.transpose(jnp.pad(img_feat, ((0, 0), (0, 0), (P, P), (P, P))),
                       (0, 2, 3, 1)).reshape(Bs * Hp * Wp, C)        # (B*Hp*Wp, C)
    dy = jnp.array([0, K, 0, K], jnp.int32)     # sub-pixel output order sf1..sf4
    dx = jnp.array([0, 0, K, K], jnp.int32)
    oy = 2 * y_id[:, :, None].astype(jnp.int32) + dy[None, None, :]  # (B, N, 4)
    ox = 2 * x_id[:, :, None].astype(jnp.int32) + dx[None, None, :]
    kk = jnp.arange(K, dtype=jnp.int32)
    yy = oy[..., None, None] + kk[:, None]                           # (B, N, 4, K, 1)
    xx = ox[..., None, None] + kk[None, :]                           # (B, N, 4, 1, K)
    boff = (jnp.arange(Bs, dtype=jnp.int32) * (Hp * Wp))[:, None, None, None, None]
    flat = boff + yy * Wp + xx                                       # (B, N, 4, K, K)
    patch = jnp.take(xp, flat.reshape(-1), axis=0)                   # (B*N*4*K*K, C)
    return patch.reshape(Bs * N, 4 * K * K * C)


def prepare_kernel_params(params):
    """Fold & pack every module parameter into (wpack [bf16], bpack [f32])."""
    E, C = EMBED_DIM, NUM_FILTERS
    f32 = jnp.float32

    # conv weight rows reordered to the cols lane order (ky, kx, c)
    w_kkc = jnp.transpose(params["conv_w"], (2, 3, 1, 0)).reshape(KKC, E)
    w1 = params["pg_w1"]                                    # (4E + GD, C), y = x @ W
    w1a, w1b = w1[:4 * E], w1[4 * E:]
    # fold the conv into the local half of the first pre_graph Linear, per sub-pixel
    w_fold = jnp.concatenate([w_kkc @ w1a[s * E:(s + 1) * E] for s in range(4)], axis=0)
    b_fold = (jnp.tile(params["conv_b"], 4) @ w1a).reshape(1, C)   # stays inside RoI mask

    # static one-hot kNN gather matrix, rows ordered (neighbour j, batch b, point n)
    nbr = jnp.transpose(params["knn_idx"][0], (1, 0))        # (k, N)
    col = (jnp.arange(B)[None, :, None] * NPOINT + nbr[:, None, :]).reshape(-1)
    gmat = jax.nn.one_hot(col, BN, dtype=f32)                # (k*BN, BN)

    w1b_pad = jnp.concatenate([w1b, jnp.zeros((16 - GRAPH_FEAT_DIM, C), f32)], axis=0)

    # StaticGraph blocks: fold BN scale column-wise; split into Wa and (Wb - Wa)
    gws, gsh = [], []
    for i in range(NUM_GRAPH):
        ws = params[f"g{i}_w"] * params[f"g{i}_scale"]
        gws += [ws[:C], ws[C:] - ws[:C]]
        gsh.append(params[f"g{i}_shift"])

    # MLP_QueryNet, zero-padded to 32 lanes throughout (padding lanes remain exactly 0)
    q_w2p = jnp.pad(params["q_w2"], ((0, 0), (0, C - QUERY_DIMS[2])))
    q_w3p = jnp.zeros((C, C), f32).at[:QUERY_DIMS[2], :2].set(params["q_w3"])
    q_b2p = jnp.pad(params["q_b2"].reshape(1, -1), ((0, 0), (0, C - QUERY_DIMS[2])))
    q_b3p = jnp.pad(params["q_b3"].reshape(1, -1), ((0, 0), (0, C - 2)))

    wpack = jnp.concatenate(
        [w_fold, gmat, w1b_pad, params["pg_w2"],
         gws[0], gws[1], gws[2], gws[3],
         params["q_w1"], q_w2p, q_w3p], axis=0).astype(jnp.bfloat16)
    assert wpack.shape == (WPACK_ROWS, C), wpack.shape

    bpack = jnp.concatenate(
        [b_fold, params["pg_b1"].reshape(1, -1), params["pg_b2"].reshape(1, -1),
         gsh[0], gsh[1],
         params["q_b1"].reshape(1, -1), q_b2p, q_b3p], axis=0).astype(f32)
    assert bpack.shape == (8, C), bpack.shape
    return wpack, bpack


# ------------------------------ forward pass -------------------------------
@jax.jit
def refine_forward(wpack, bpack, img_feat, graph_feat, p3d_normed, roi_mask_bit,
                   prev_x_id, prev_y_id):
    # p3d_normed is accepted for API parity; MLP_QueryNet ignores its pts argument.
    Bs = img_feat.shape[0]
    N = prev_x_id.shape[1]
    cols = gather_patch_cols(img_feat, prev_x_id, prev_y_id, LOCAL_K).astype(jnp.bfloat16)
    gfeat_rows = jnp.transpose(graph_feat, (0, 2, 1)).reshape(Bs * N, -1)
    roi_rows = jnp.transpose(roi_mask_bit, (0, 2, 1)).reshape(Bs * N, 1)
    dyn = jnp.concatenate([gfeat_rows, roi_rows], axis=1)            # (BN, GD+1) f32

    out = fused_refine_call(cols, dyn, wpack, bpack)                 # (BN, 128) lane-dense

    feat = out[:, :NUM_FILTERS]
    bits = out[:, NUM_FILTERS:NUM_FILTERS + 2]
    output_bits = bits.reshape(Bs, N, 2).transpose(0, 2, 1)          # (B, 2, N)
    output_feat = feat.reshape(Bs, N, NUM_FILTERS).transpose(0, 2, 1)  # (B, C, N)
    return output_bits, output_feat


# --------------------------- deterministic params ---------------------------
def init_params(key):
    ks = jax.random.split(key, 20)
    p = {}
    p["conv_w"] = 0.05 * jax.random.normal(
        ks[0], (EMBED_DIM, NUM_FILTERS, LOCAL_K, LOCAL_K), jnp.float32)
    p["conv_b"] = 0.05 * jax.random.normal(ks[1], (EMBED_DIM,), jnp.float32)

    # pre_graph_module: (C + Gd) -> C -> C
    p["pg_w1"] = 0.05 * jax.random.normal(
        ks[2], (NUM_FILTERS + GRAPH_FEAT_DIM, NUM_FILTERS), jnp.float32)
    p["pg_b1"] = 0.05 * jax.random.normal(ks[3], (NUM_FILTERS,), jnp.float32)
    p["pg_w2"] = 0.05 * jax.random.normal(ks[4], (NUM_FILTERS, NUM_FILTERS), jnp.float32)
    p["pg_b2"] = 0.05 * jax.random.normal(ks[5], (NUM_FILTERS,), jnp.float32)

    # StaticGraph_module blocks: 1x1 conv (2C -> C, no bias) + BatchNorm (inference, folded)
    for i in range(NUM_GRAPH):
        kk = jax.random.split(ks[6 + i], 5)
        w = 0.05 * jax.random.normal(kk[0], (2 * NUM_FILTERS, NUM_FILTERS), jnp.float32)
        gamma = 1.0 + 0.05 * jax.random.normal(kk[1], (NUM_FILTERS,), jnp.float32)
        beta = 0.05 * jax.random.normal(kk[2], (NUM_FILTERS,), jnp.float32)
        rmean = 0.05 * jax.random.normal(kk[3], (NUM_FILTERS,), jnp.float32)
        rvar = jnp.abs(1.0 + 0.05 * jax.random.normal(kk[4], (NUM_FILTERS,), jnp.float32))
        scale = gamma / jnp.sqrt(rvar + 1e-5)
        shift = beta - rmean * scale
        p[f"g{i}_w"] = w
        p[f"g{i}_scale"] = scale.reshape(1, -1)
        p[f"g{i}_shift"] = shift.reshape(1, -1)

    # MLP_QueryNet: 32 -> 32 -> 16 -> 2
    dims = QUERY_DIMS + (2,)
    for j in range(3):
        p[f"q_w{j+1}"] = 0.05 * jax.random.normal(
            ks[10 + 2 * j], (dims[j], dims[j + 1]), jnp.float32)
        p[f"q_b{j+1}"] = 0.05 * jax.random.normal(
            ks[11 + 2 * j], (dims[j + 1],), jnp.float32)
    return p


# ----------------------------------- main -----------------------------------
if __name__ == "__main__":
    key = jax.random.PRNGKey(0)
    kp_key, kd = jax.random.split(key)
    params = init_params(kp_key)

    keys = jax.random.split(kd, 8)
    # canonical 3D keypoints (used in __init__ for kNN and in forward)
    p3d_base = jnp.tanh(jax.random.normal(keys[0], (1, 3, NPOINT), jnp.float32))
    params["knn_idx"] = knn_indices(p3d_base, GRAPH_K)                # (1, N, k)

    wpack, bpack = prepare_kernel_params(params)                      # folded & packed once

    img_feat = jax.random.normal(keys[1], (B, NUM_FILTERS, H, W), jnp.float32)
    graph_feat = jax.random.normal(keys[2], (B, GRAPH_FEAT_DIM, NPOINT), jnp.float32)
    p3d_normed = jnp.broadcast_to(p3d_base, (B, 3, NPOINT))
    roi_mask_bit = (jax.random.uniform(keys[3], (B, 1, NPOINT)) > 0.3).astype(jnp.float32)
    prev_x_id = jax.random.randint(keys[4], (B, NPOINT), 0, H // 2)
    prev_y_id = jax.random.randint(keys[5], (B, NPOINT), 0, H // 2)

    out_bits, out_feat = refine_forward(wpack, bpack, img_feat, graph_feat, p3d_normed,
                                        roi_mask_bit, prev_x_id, prev_y_id)
    jax.block_until_ready((out_bits, out_feat))

    assert out_bits.shape == (B, 2, NPOINT), out_bits.shape
    assert out_feat.shape == (B, NUM_FILTERS, NPOINT), out_feat.shape
    assert jnp.all(jnp.isfinite(out_bits)) and jnp.all(jnp.isfinite(out_feat))
    print("KERNEL_OK")
</pallas_src>

<mosaic_0001>
module attributes {stable_mosaic.version = 11 : i64} {
  func.func @fused_refine_kernel(%arg0: memref<32x512xbf16, #tpu.memory_space<vmem>>, %arg1: memref<32x9xf32, #tpu.memory_space<vmem>>, %arg2: memref<912x32xbf16, #tpu.memory_space<vmem>>, %arg3: memref<8x32xf32, #tpu.memory_space<vmem>>, %arg4: memref<32x128xf32, #tpu.memory_space<vmem>>) attributes {dimension_semantics = [], scalar_prefetch = 0 : i64, scratch_operands = 0 : i64, tpu.core_type = #tpu.core_type<tc>} {
    %c0 = arith.constant 0 : index
    %c0_0 = arith.constant 0 : index
    %0 = vector.load %arg3[%c0, %c0_0] : memref<8x32xf32, #tpu.memory_space<vmem>>, vector<8x32xf32>
    %c0_1 = arith.constant 0 : index
    %c0_2 = arith.constant 0 : index
    %1 = vector.load %arg1[%c0_1, %c0_2] : memref<32x9xf32, #tpu.memory_space<vmem>>, vector<32x9xf32>
    %2 = vector.extract_strided_slice %1 {offsets = [0, 0], sizes = [32, 8], strides = [1, 1]} : vector<32x9xf32> to vector<32x8xf32>
    %3 = arith.truncf %2 : vector<32x8xf32> to vector<32x8xbf16>
    %4 = vector.extract_strided_slice %1 {offsets = [0, 8], sizes = [32, 1], strides = [1, 1]} : vector<32x9xf32> to vector<32x1xf32>
    %c0_3 = arith.constant 0 : index
    %c0_4 = arith.constant 0 : index
    %5 = vector.load %arg0[%c0_3, %c0_4] : memref<32x512xbf16, #tpu.memory_space<vmem>>, vector<32x512xbf16>
    %c0_5 = arith.constant 0 : index
    %c0_6 = arith.constant 0 : index
    %6 = vector.load %arg2[%c0_5, %c0_6] : memref<912x32xbf16, #tpu.memory_space<vmem>>, vector<512x32xbf16>
    %cst = arith.constant dense<0.000000e+00> : vector<32x32xf32>
    %7 = tpu.matmul %5, %6, %cst {dimension_numbers = #tpu.dot_dimension_numbers<[1], [0], [0], [1], [0, 0, 1, 1], [], []>} : vector<32x512xbf16>, vector<512x32xbf16>, vector<32x32xf32> -> vector<32x32xf32>
    %8 = vector.extract_strided_slice %0 {offsets = [0, 0], sizes = [1, 32], strides = [1, 1]} : vector<8x32xf32> to vector<1x32xf32>
    %9 = vector.broadcast %8 : vector<1x32xf32> to vector<32x32xf32>
    %10 = arith.addf %7, %9 : vector<32x32xf32>
    %11 = vector.broadcast %4 : vector<32x1xf32> to vector<32x32xf32>
    %12 = arith.mulf %11, %10 : vector<32x32xf32>
    %c640 = arith.constant 640 : index
    %c0_7 = arith.constant 0 : index
    %13 = vector.load %arg2[%c640, %c0_7] : memref<912x32xbf16, #tpu.memory_space<vmem>>, vector<8x32xbf16>
    %cst_8 = arith.constant dense<0.000000e+00> : vector<32x32xf32>
    %14 = tpu.matmul %3, %13, %cst_8 {dimension_numbers = #tpu.dot_dimension_numbers<[1], [0], [0], [1], [0, 0, 1, 1], [], []>} : vector<32x8xbf16>, vector<8x32xbf16>, vector<32x32xf32> -> vector<32x32xf32>
    %15 = arith.addf %12, %14 : vector<32x32xf32>
    %16 = vector.extract_strided_slice %0 {offsets = [1, 0], sizes = [1, 32], strides = [1, 1]} : vector<8x32xf32> to vector<1x32xf32>
    %17 = vector.broadcast %16 : vector<1x32xf32> to vector<32x32xf32>
    %18 = arith.addf %15, %17 : vector<32x32xf32>
    %cst_9 = arith.constant 0.000000e+00 : f32
    %19 = vector.broadcast %cst_9 : f32 to vector<32x32xf32>
    %20 = arith.cmpf ogt, %18, %19 : vector<32x32xf32>
    %cst_10 = arith.constant 0.00999999977 : f32
    %21 = vector.broadcast %cst_10 : f32 to vector<32x32xf32>
    %22 = arith.mulf %21, %18 : vector<32x32xf32>
    %23 = arith.select %20, %18, %22 : vector<32x32xi1>, vector<32x32xf32>
    %24 = arith.truncf %23 : vector<32x32xf32> to vector<32x32xbf16>
    %c656 = arith.constant 656 : index
    %c0_11 = arith.constant 0 : index
    %25 = vector.load %arg2[%c656, %c0_11] : memref<912x32xbf16, #tpu.memory_space<vmem>>, vector<32x32xbf16>
    %cst_12 = arith.constant dense<0.000000e+00> : vector<32x32xf32>
    %26 = tpu.matmul %24, %25, %cst_12 {dimension_numbers = #tpu.dot_dimension_numbers<[1], [0], [0], [1], [0, 0, 1, 1], [], []>} : vector<32x32xbf16>, vector<32x32xbf16>, vector<32x32xf32> -> vector<32x32xf32>
    %27 = vector.extract_strided_slice %0 {offsets = [2, 0], sizes = [1, 32], strides = [1, 1]} : vector<8x32xf32> to vector<1x32xf32>
    %28 = vector.broadcast %27 : vector<1x32xf32> to vector<32x32xf32>
    %29 = arith.addf %26, %28 : vector<32x32xf32>
    %cst_13 = arith.constant 0.000000e+00 : f32
    %30 = vector.broadcast %cst_13 : f32 to vector<32x32xf32>
    %31 = arith.cmpf ogt, %29, %30 : vector<32x32xf32>
    %cst_14 = arith.constant 0.00999999977 : f32
    %32 = vector.broadcast %cst_14 : f32 to vector<32x32xf32>
    %33 = arith.mulf %32, %29 : vector<32x32xf32>
    %34 = arith.select %31, %29, %33 : vector<32x32xi1>, vector<32x32xf32>
    %c512 = arith.constant 512 : index
    %c0_15 = arith.constant 0 : index
    %35 = vector.load %arg2[%c512, %c0_15] : memref<912x32xbf16, #tpu.memory_space<vmem>>, vector<128x32xbf16>
    %c688 = arith.constant 688 : index
    %c0_16 = arith.constant 0 : index
    %36 = vector.load %arg2[%c688, %c0_16] : memref<912x32xbf16, #tpu.memory_space<vmem>>, vector<32x32xbf16>
    %c720 = arith.constant 720 : index
    %c0_17 = arith.constant 0 : index
    %37 = vector.load %arg2[%c720, %c0_17] : memref<912x32xbf16, #tpu.memory_space<vmem>>, vector<32x32xbf16>
    %38 = arith.truncf %34 : vector<32x32xf32> to vector<32x32xbf16>
    %cst_18 = arith.constant dense<0.000000e+00> : vector<32x32xf32>
    %39 = tpu.matmul %38, %36, %cst_18 {dimension_numbers = #tpu.dot_dimension_numbers<[1], [0], [0], [1], [0, 0, 1, 1], [], []>} : vector<32x32xbf16>, vector<32x32xbf16>, vector<32x32xf32> -> vector<32x32xf32>
    %cst_19 = arith.constant dense<0.000000e+00> : vector<32x32xf32>
    %40 = tpu.matmul %38, %37, %cst_19 {dimension_numbers = #tpu.dot_dimension_numbers<[1], [0], [0], [1], [0, 0, 1, 1], [], []>} : vector<32x32xbf16>, vector<32x32xbf16>, vector<32x32xf32> -> vector<32x32xf32>
    %41 = vector.extract_strided_slice %0 {offsets = [3, 0], sizes = [1, 32], strides = [1, 1]} : vector<8x32xf32> to vector<1x32xf32>
    %42 = vector.broadcast %41 : vector<1x32xf32> to vector<32x32xf32>
    %43 = arith.addf %40, %42 : vector<32x32xf32>
    %44 = arith.truncf %39 : vector<32x32xf32> to vector<32x32xbf16>
    %cst_20 = arith.constant dense<0.000000e+00> : vector<128x32xf32>
    %45 = tpu.matmul %35, %44, %cst_20 {dimension_numbers = #tpu.dot_dimension_numbers<[1], [0], [0], [1], [0, 0, 1, 1], [], []>} : vector<128x32xbf16>, vector<32x32xbf16>, vector<128x32xf32> -> vector<128x32xf32>
    %46 = vector.extract_strided_slice %45 {offsets = [0, 0], sizes = [32, 32], strides = [1, 1]} : vector<128x32xf32> to vector<32x32xf32>
    %47 = vector.extract_strided_slice %45 {offsets = [32, 0], sizes = [32, 32], strides = [1, 1]} : vector<128x32xf32> to vector<32x32xf32>
    %48 = arith.maximumf %46, %47 : vector<32x32xf32>
    %49 = vector.extract_strided_slice %45 {offsets = [64, 0], sizes = [32, 32], strides = [1, 1]} : vector<128x32xf32> to vector<32x32xf32>
    %50 = arith.maximumf %48, %49 : vector<32x32xf32>
    %51 = vector.extract_strided_slice %45 {offsets = [96, 0], sizes = [32, 32], strides = [1, 1]} : vector<128x32xf32> to vector<32x32xf32>
    %52 = arith.maximumf %50, %51 : vector<32x32xf32>
    %53 = arith.addf %52, %43 : vector<32x32xf32>
    %cst_21 = arith.constant 0.000000e+00 : f32
    %54 = vector.broadcast %cst_21 : f32 to vector<32x32xf32>
    %55 = arith.cmpf ogt, %53, %54 : vector<32x32xf32>
    %cst_22 = arith.constant 2.000000e-01 : f32
    %56 = vector.broadcast %cst_22 : f32 to vector<32x32xf32>
    %57 = arith.mulf %56, %53 : vector<32x32xf32>
    %58 = arith.select %55, %53, %57 : vector<32x32xi1>, vector<32x32xf32>
    %c752 = arith.constant 752 : index
    %c0_23 = arith.constant 0 : index
    %59 = vector.load %arg2[%c752, %c0_23] : memref<912x32xbf16, #tpu.memory_space<vmem>>, vector<32x32xbf16>
    %c784 = arith.constant 784 : index
    %c0_24 = arith.constant 0 : index
    %60 = vector.load %arg2[%c784, %c0_24] : memref<912x32xbf16, #tpu.memory_space<vmem>>, vector<32x32xbf16>
    %61 = arith.truncf %58 : vector<32x32xf32> to vector<32x32xbf16>
    %cst_25 = arith.constant dense<0.000000e+00> : vector<32x32xf32>
    %62 = tpu.matmul %61, %59, %cst_25 {dimension_numbers = #tpu.dot_dimension_numbers<[1], [0], [0], [1], [0, 0, 1, 1], [], []>} : vector<32x32xbf16>, vector<32x32xbf16>, vector<32x32xf32> -> vector<32x32xf32>
    %cst_26 = arith.constant dense<0.000000e+00> : vector<32x32xf32>
    %63 = tpu.matmul %61, %60, %cst_26 {dimension_numbers = #tpu.dot_dimension_numbers<[1], [0], [0], [1], [0, 0, 1, 1], [], []>} : vector<32x32xbf16>, vector<32x32xbf16>, vector<32x32xf32> -> vector<32x32xf32>
    %64 = vector.extract_strided_slice %0 {offsets = [4, 0], sizes = [1, 32], strides = [1, 1]} : vector<8x32xf32> to vector<1x32xf32>
    %65 = vector.broadcast %64 : vector<1x32xf32> to vector<32x32xf32>
    %66 = arith.addf %63, %65 : vector<32x32xf32>
    %67 = arith.truncf %62 : vector<32x32xf32> to vector<32x32xbf16>
    %cst_27 = arith.constant dense<0.000000e+00> : vector<128x32xf32>
    %68 = tpu.matmul %35, %67, %cst_27 {dimension_numbers = #tpu.dot_dimension_numbers<[1], [0], [0], [1], [0, 0, 1, 1], [], []>} : vector<128x32xbf16>, vector<32x32xbf16>, vector<128x32xf32> -> vector<128x32xf32>
    %69 = vector.extract_strided_slice %68 {offsets = [0, 0], sizes = [32, 32], strides = [1, 1]} : vector<128x32xf32> to vector<32x32xf32>
    %70 = vector.extract_strided_slice %68 {offsets = [32, 0], sizes = [32, 32], strides = [1, 1]} : vector<128x32xf32> to vector<32x32xf32>
    %71 = arith.maximumf %69, %70 : vector<32x32xf32>
    %72 = vector.extract_strided_slice %68 {offsets = [64, 0], sizes = [32, 32], strides = [1, 1]} : vector<128x32xf32> to vector<32x32xf32>
    %73 = arith.maximumf %71, %72 : vector<32x32xf32>
    %74 = vector.extract_strided_slice %68 {offsets = [96, 0], sizes = [32, 32], strides = [1, 1]} : vector<128x32xf32> to vector<32x32xf32>
    %75 = arith.maximumf %73, %74 : vector<32x32xf32>
    %76 = arith.addf %75, %66 : vector<32x32xf32>
    %cst_28 = arith.constant 0.000000e+00 : f32
    %77 = vector.broadcast %cst_28 : f32 to vector<32x32xf32>
    %78 = arith.cmpf ogt, %76, %77 : vector<32x32xf32>
    %cst_29 = arith.constant 2.000000e-01 : f32
    %79 = vector.broadcast %cst_29 : f32 to vector<32x32xf32>
    %80 = arith.mulf %79, %76 : vector<32x32xf32>
    %81 = arith.select %78, %76, %80 : vector<32x32xi1>, vector<32x32xf32>
    %82 = arith.truncf %81 : vector<32x32xf32> to vector<32x32xbf16>
    %c816 = arith.constant 816 : index
    %c0_30 = arith.constant 0 : index
    %83 = vector.load %arg2[%c816, %c0_30] : memref<912x32xbf16, #tpu.memory_space<vmem>>, vector<32x32xbf16>
    %cst_31 = arith.constant dense<0.000000e+00> : vector<32x32xf32>
    %84 = tpu.matmul %82, %83, %cst_31 {dimension_numbers = #tpu.dot_dimension_numbers<[1], [0], [0], [1], [0, 0, 1, 1], [], []>} : vector<32x32xbf16>, vector<32x32xbf16>, vector<32x32xf32> -> vector<32x32xf32>
    %85 = vector.extract_strided_slice %0 {offsets = [5, 0], sizes = [1, 32], strides = [1, 1]} : vector<8x32xf32> to vector<1x32xf32>
    %86 = vector.broadcast %85 : vector<1x32xf32> to vector<32x32xf32>
    %87 = arith.addf %84, %86 : vector<32x32xf32>
    %cst_32 = arith.constant 0.000000e+00 : f32
    %88 = vector.broadcast %cst_32 : f32 to vector<32x32xf32>
    %89 = arith.cmpf ogt, %87, %88 : vector<32x32xf32>
    %cst_33 = arith.constant 0.00999999977 : f32
    %90 = vector.broadcast %cst_33 : f32 to vector<32x32xf32>
    %91 = arith.mulf %90, %87 : vector<32x32xf32>
    %92 = arith.select %89, %87, %91 : vector<32x32xi1>, vector<32x32xf32>
    %93 = arith.truncf %92 : vector<32x32xf32> to vector<32x32xbf16>
    %c848 = arith.constant 848 : index
    %c0_34 = arith.constant 0 : index
    %94 = vector.load %arg2[%c848, %c0_34] : memref<912x32xbf16, #tpu.memory_space<vmem>>, vector<32x32xbf16>
    %cst_35 = arith.constant dense<0.000000e+00> : vector<32x32xf32>
    %95 = tpu.matmul %93, %94, %cst_35 {dimension_numbers = #tpu.dot_dimension_numbers<[1], [0], [0], [1], [0, 0, 1, 1], [], []>} : vector<32x32xbf16>, vector<32x32xbf16>, vector<32x32xf32> -> vector<32x32xf32>
    %96 = vector.extract_strided_slice %0 {offsets = [6, 0], sizes = [1, 32], strides = [1, 1]} : vector<8x32xf32> to vector<1x32xf32>
    %97 = vector.broadcast %96 : vector<1x32xf32> to vector<32x32xf32>
    %98 = arith.addf %95, %97 : vector<32x32xf32>
    %cst_36 = arith.constant 0.000000e+00 : f32
    %99 = vector.broadcast %cst_36 : f32 to vector<32x32xf32>
    %100 = arith.cmpf ogt, %98, %99 : vector<32x32xf32>
    %cst_37 = arith.constant 0.00999999977 : f32
    %101 = vector.broadcast %cst_37 : f32 to vector<32x32xf32>
    %102 = arith.mulf %101, %98 : vector<32x32xf32>
    %103 = arith.select %100, %98, %102 : vector<32x32xi1>, vector<32x32xf32>
    %104 = arith.truncf %103 : vector<32x32xf32> to vector<32x32xbf16>
    %c880 = arith.constant 880 : index
    %c0_38 = arith.constant 0 : index
    %105 = vector.load %arg2[%c880, %c0_38] : memref<912x32xbf16, #tpu.memory_space<vmem>>, vector<32x32xbf16>
    %cst_39 = arith.constant dense<0.000000e+00> : vector<32x32xf32>
    %106 = tpu.matmul %104, %105, %cst_39 {dimension_numbers = #tpu.dot_dimension_numbers<[1], [0], [0], [1], [0, 0, 1, 1], [], []>} : vector<32x32xbf16>, vector<32x32xbf16>, vector<32x32xf32> -> vector<32x32xf32>
    %107 = vector.extract_strided_slice %0 {offsets = [7, 0], sizes = [1, 32], strides = [1, 1]} : vector<8x32xf32> to vector<1x32xf32>
    %108 = vector.broadcast %107 : vector<1x32xf32> to vector<32x32xf32>
    %109 = arith.addf %106, %108 : vector<32x32xf32>
    %cst_40 = arith.constant 0.000000e+00 : f32
    %110 = vector.broadcast %cst_40 : f32 to vector<32x64xf32>
    %111 = tpu.concatenate %81, %109, %110 in 1 : vector<32x32xf32>, vector<32x32xf32>, vector<32x64xf32> -> vector<32x128xf32>
    %c0_41 = arith.constant 0 : index
    %c0_42 = arith.constant 0 : index
    %112 = vector.load %arg4[%c0_41, %c0_42] : memref<32x128xf32, #tpu.memory_space<vmem>>, vector<32x128xf32>
    tpu.vector_store %arg4[%c0_41, %c0_42], %111 {strides = array<i32>} : memref<32x128xf32, #tpu.memory_space<vmem>>, vector<32x128xf32>,
    return
  }
}

</mosaic_0001>

<llo_original>
// kernel: refine_forward.1
$region0: #{refine_forward.1}
  #allocation0 [shape = 'u32[]', space=smem, size = 0x4, offset = 0x4, fixed_abs, tag = 'smem constant byte address 0x4 - core index']
  #allocation1 [shape = 'u32[144,128]{1,0:T(1,128)}', space=vmem, size = 0x12000, scoped, tag = 'internal scratch']
  %s0 = inlined_call_operand.vmem [shape: bf16[32,512], index: 0, kind: input, shape index: {}]
  %s1 = inlined_call_operand.vmem [shape: f32[32,9], index: 1, kind: input, shape index: {}]
  %s2 = inlined_call_operand.vmem [shape: bf16[912,32], index: 2, kind: input, shape index: {}]
  %s3 = inlined_call_operand.vmem [shape: f32[8,32], index: 3, kind: input, shape index: {}]
  %s4 = inlined_call_operand.vmem [shape: f32[32,128], index: 4, kind: output, shape index: {}]
  %s5 = sld [smem:[#allocation0]]
  $region26: #{refine_forward.1} parent=0
    _
  %s7 = ssub.s32 1, %s5
  %s8 = scalar_select 0, %s7, %s5
  // Predicated region
  $region2: #{refine_forward.1} parent=0 // pred_check
    _
  $region3: #{refine_forward.1} parent=0 // pred_check_branch
    %10 = sbr.rel (0) target = $region5
  $region4: #{refine_forward.1} parent=0 // pred_region
    _
  $region5: #{refine_forward.1} parent=0 // pred_fallthru
    _
  // Predicated region
  $region6: #{refine_forward.1} parent=0 // pred_check
    _
  $region7: #{refine_forward.1} parent=0 // pred_check_branch
    %12 = sbr.rel (0) target = $region9
  $region8: #{refine_forward.1} parent=0 // pred_region
    _
  $region9: #{refine_forward.1} parent=0 // pred_fallthru
    _
  // Predicated region
  $region10: #{refine_forward.1} parent=0 // pred_check
    _
  $region11: #{refine_forward.1} parent=0 // pred_check_branch
    %14 = sbr.rel (0) target = $region13
  $region12: #{refine_forward.1} parent=0 // pred_region
    _
  $region13: #{refine_forward.1} parent=0 // pred_fallthru
    _
  // Predicated region
  $region14: #{refine_forward.1} parent=0 // pred_check
    _
  $region15: #{refine_forward.1} parent=0 // pred_check_branch
    %16 = sbr.rel (0) target = $region17
  $region16: #{refine_forward.1} parent=0 // pred_region
    _
  $region17: #{refine_forward.1} parent=0 // pred_fallthru
    _
  %v18 = vld [vmem:[%s3] sm:$0xff]
  %v19 = vld [vmem:[%s1] sm:$0xff]
  %v20 = vld [vmem:[%s1 + $0x8] sm:$0xff]
  %v21 = vld [vmem:[%s1 + $0x10] sm:$0xff]
  %v22 = vld [vmem:[%s1 + $0x18] sm:$0xff]
  %v23 = vpack.c.bf16 %v20, %v19
  %v24 = vpack.c.bf16 %v22, %v21
  %v25 = vld [vmem:[%s0] sm:$0xff]
  %v26 = vld [vmem:[%s0 + $0x8] sm:$0xff]
  %v27 = vld [vmem:[%s0 + $0x10] sm:$0xff]
  %v28 = vld [vmem:[%s0 + $0x18] sm:$0xff]
  %v29 = vld [vmem:[%s0 + $0x20] sm:$0xff]
  %v30 = vld [vmem:[%s0 + $0x28] sm:$0xff]
  %v31 = vld [vmem:[%s0 + $0x30] sm:$0xff]
  %v32 = vld [vmem:[%s0 + $0x38] sm:$0xff]
  %v33 = vld [vmem:[%s2] sm:$0xf]
  %v34 = vld [vmem:[%s2 + $0x4] sm:$0xf]
  %v35 = vld [vmem:[%s2 + $0x8] sm:$0xf]
  %v36 = vld [vmem:[%s2 + $0xc] sm:$0xf]
  %v37 = vld [vmem:[%s2 + $0x10] sm:$0xf]
  %v38 = vld [vmem:[%s2 + $0x14] sm:$0xf]
  %v39 = vld [vmem:[%s2 + $0x18] sm:$0xf]
  %v40 = vld [vmem:[%s2 + $0x1c] sm:$0xf]
  %v41 = vld [vmem:[%s2 + $0x20] sm:$0xf]
  %v42 = vld [vmem:[%s2 + $0x24] sm:$0xf]
  %v43 = vld [vmem:[%s2 + $0x28] sm:$0xf]
  %v44 = vld [vmem:[%s2 + $0x2c] sm:$0xf]
  %v45 = vld [vmem:[%s2 + $0x30] sm:$0xf]
  %v46 = vld [vmem:[%s2 + $0x34] sm:$0xf]
  %v47 = vld [vmem:[%s2 + $0x38] sm:$0xf]
  %v48 = vld [vmem:[%s2 + $0x3c] sm:$0xf]
  %v49 = vld [vmem:[%s2 + $0x40] sm:$0xf]
  %v50 = vld [vmem:[%s2 + $0x44] sm:$0xf]
  %v51 = vld [vmem:[%s2 + $0x48] sm:$0xf]
  %v52 = vld [vmem:[%s2 + $0x4c] sm:$0xf]
  %v53 = vld [vmem:[%s2 + $0x50] sm:$0xf]
  %v54 = vld [vmem:[%s2 + $0x54] sm:$0xf]
  %v55 = vld [vmem:[%s2 + $0x58] sm:$0xf]
  %v56 = vld [vmem:[%s2 + $0x5c] sm:$0xf]
  %v57 = vld [vmem:[%s2 + $0x60] sm:$0xf]
  %v58 = vld [vmem:[%s2 + $0x64] sm:$0xf]
  %v59 = vld [vmem:[%s2 + $0x68] sm:$0xf]
  %v60 = vld [vmem:[%s2 + $0x6c] sm:$0xf]
  %v61 = vld [vmem:[%s2 + $0x70] sm:$0xf]
  %v62 = vld [vmem:[%s2 + $0x74] sm:$0xf]
  %v63 = vld [vmem:[%s2 + $0x78] sm:$0xf]
  %v64 = vld [vmem:[%s2 + $0x7c] sm:$0xf]
  %v65 = vld [vmem:[%s2 + $0x80] sm:$0xf]
  %v66 = vld [vmem:[%s2 + $0x84] sm:$0xf]
  %v67 = vld [vmem:[%s2 + $0x88] sm:$0xf]
  %v68 = vld [vmem:[%s2 + $0x8c] sm:$0xf]
  %v69 = vld [vmem:[%s2 + $0x90] sm:$0xf]
  %v70 = vld [vmem:[%s2 + $0x94] sm:$0xf]
  %v71 = vld [vmem:[%s2 + $0x98] sm:$0xf]
  %v72 = vld [vmem:[%s2 + $0x9c] sm:$0xf]
  %v73 = vld [vmem:[%s2 + $0xa0] sm:$0xf]
  %v74 = vld [vmem:[%s2 + $0xa4] sm:$0xf]
  %v75 = vld [vmem:[%s2 + $0xa8] sm:$0xf]
  %v76 = vld [vmem:[%s2 + $0xac] sm:$0xf]
  %v77 = vld [vmem:[%s2 + $0xb0] sm:$0xf]
  %v78 = vld [vmem:[%s2 + $0xb4] sm:$0xf]
  %v79 = vld [vmem:[%s2 + $0xb8] sm:$0xf]
  %v80 = vld [vmem:[%s2 + $0xbc] sm:$0xf]
  %v81 = vld [vmem:[%s2 + $0xc0] sm:$0xf]
  %v82 = vld [vmem:[%s2 + $0xc4] sm:$0xf]
  %v83 = vld [vmem:[%s2 + $0xc8] sm:$0xf]
  %v84 = vld [vmem:[%s2 + $0xcc] sm:$0xf]
  %v85 = vld [vmem:[%s2 + $0xd0] sm:$0xf]
  %v86 = vld [vmem:[%s2 + $0xd4] sm:$0xf]
  %v87 = vld [vmem:[%s2 + $0xd8] sm:$0xf]
  %v88 = vld [vmem:[%s2 + $0xdc] sm:$0xf]
  %v89 = vld [vmem:[%s2 + $0xe0] sm:$0xf]
  %v90 = vld [vmem:[%s2 + $0xe4] sm:$0xf]
  %v91 = vld [vmem:[%s2 + $0xe8] sm:$0xf]
  %v92 = vld [vmem:[%s2 + $0xec] sm:$0xf]
  %v93 = vld [vmem:[%s2 + $0xf0] sm:$0xf]
  %v94 = vld [vmem:[%s2 + $0xf4] sm:$0xf]
  %v95 = vld [vmem:[%s2 + $0xf8] sm:$0xf]
  %v96 = vld [vmem:[%s2 + $0xfc] sm:$0xf]
  %v97 = vlaneseq
  %v98 = vshrl.u32 %v97, 7
  %v99 = vsub.s32 0, %v98
  %v100 = vrot.slane %v18, %v99
  %v109 = vunpack.c.l.b16 %v25
  %v110 = vunpack.c.h.b16 %v25
  %v111 = vunpack.c.l.b16 %v26
  %v112 = vunpack.c.h.b16 %v26
  %v113 = vunpack.c.l.b16 %v27
  %v114 = vunpack.c.h.b16 %v27
  %v115 = vunpack.c.l.b16 %v28
  %v116 = vunpack.c.h.b16 %v28
  %v117 = vunpack.c.l.b16 %v29
  %v118 = vunpack.c.h.b16 %v29
  %v119 = vunpack.c.l.b16 %v30
  %v120 = vunpack.c.h.b16 %v30
  %v121 = vunpack.c.l.b16 %v31
  %v122 = vunpack.c.h.b16 %v31
  %v123 = vunpack.c.l.b16 %v32
  %v124 = vunpack.c.h.b16 %v32
  %v125 = vpack.c.b16 %v113, %v109
  %v126 = vpack.c.b16 %v114, %v110
  %v127 = vpack.c.b16 %v115, %v111
  %v128 = vpack.c.b16 %v116, %v112
  %v129 = vpack.c.b16 %v121, %v117
  %v130 = vpack.c.b16 %v122, %v118
  %v131 = vpack.c.b16 %v123, %v119
  %v132 = vpack.c.b16 %v124, %v120
  %v205 = vunpack.c.l.b16 %v33
  %v206 = vunpack.c.l.b16 %v34
  %v207 = vunpack.c.l.b16 %v35
  %v208 = vunpack.c.l.b16 %v36
  %v209 = vunpack.c.l.b16 %v37
  %v210 = vunpack.c.l.b16 %v38
  %v211 = vunpack.c.l.b16 %v39
  %v212 = vunpack.c.l.b16 %v40
  %v213 = vunpack.c.l.b16 %v41
  %v214 = vunpack.c.l.b16 %v42
  %v215 = vunpack.c.l.b16 %v43
  %v216 = vunpack.c.l.b16 %v44
  %v217 = vunpack.c.l.b16 %v45
  %v218 = vunpack.c.l.b16 %v46
  %v219 = vunpack.c.l.b16 %v47
  %v220 = vunpack.c.l.b16 %v48
  %v221 = vunpack.c.l.b16 %v49
  %v222 = vunpack.c.l.b16 %v50
  %v223 = vunpack.c.l.b16 %v51
  %v224 = vunpack.c.l.b16 %v52
  %v225 = vunpack.c.l.b16 %v53
  %v226 = vunpack.c.l.b16 %v54
  %v227 = vunpack.c.l.b16 %v55
  %v228 = vunpack.c.l.b16 %v56
  %v229 = vunpack.c.l.b16 %v57
  %v230 = vunpack.c.l.b16 %v58
  %v231 = vunpack.c.l.b16 %v59
  %v232 = vunpack.c.l.b16 %v60
  %v233 = vunpack.c.l.b16 %v61
  %v234 = vunpack.c.l.b16 %v62
  %v235 = vunpack.c.l.b16 %v63
  %v236 = vunpack.c.l.b16 %v64
  %v237 = vunpack.c.l.b16 %v65
  %v238 = vunpack.c.l.b16 %v66
  %v239 = vunpack.c.l.b16 %v67
  %v240 = vunpack.c.l.b16 %v68
  %v241 = vunpack.c.l.b16 %v69
  %v242 = vunpack.c.l.b16 %v70
  %v243 = vunpack.c.l.b16 %v71
  %v244 = vunpack.c.l.b16 %v72
  %v245 = vunpack.c.l.b16 %v73
  %v246 = vunpack.c.l.b16 %v74
  %v247 = vunpack.c.l.b16 %v75
  %v248 = vunpack.c.l.b16 %v76
  %v249 = vunpack.c.l.b16 %v77
  %v250 = vunpack.c.l.b16 %v78
  %v251 = vunpack.c.l.b16 %v79
  %v252 = vunpack.c.l.b16 %v80
  %v253 = vunpack.c.l.b16 %v81
  %v254 = vunpack.c.l.b16 %v82
  %v255 = vunpack.c.l.b16 %v83
  %v256 = vunpack.c.l.b16 %v84
  %v257 = vunpack.c.l.b16 %v85
  %v258 = vunpack.c.l.b16 %v86
  %v259 = vunpack.c.l.b16 %v87
  %v260 = vunpack.c.l.b16 %v88
  %v261 = vunpack.c.l.b16 %v89
  %v262 = vunpack.c.l.b16 %v90
  %v263 = vunpack.c.l.b16 %v91
  %v264 = vunpack.c.l.b16 %v92
  %v265 = vunpack.c.l.b16 %v93
  %v266 = vunpack.c.l.b16 %v94
  %v267 = vunpack.c.l.b16 %v95
  %v268 = vunpack.c.l.b16 %v96
  %v269 = vpack.c.b16 %v206, %v205
  %v270 = vpack.c.b16 %v208, %v207
  %v271 = vpack.c.b16 %v210, %v209
  %v272 = vpack.c.b16 %v212, %v211
  %v273 = vpack.c.b16 %v214, %v213
  %v274 = vpack.c.b16 %v216, %v215
  %v275 = vpack.c.b16 %v218, %v217
  %v276 = vpack.c.b16 %v220, %v219
  %v277 = vpack.c.b16 %v222, %v221
  %v278 = vpack.c.b16 %v224, %v223
  %v279 = vpack.c.b16 %v226, %v225
  %v280 = vpack.c.b16 %v228, %v227
  %v281 = vpack.c.b16 %v230, %v229
  %v282 = vpack.c.b16 %v232, %v231
  %v283 = vpack.c.b16 %v234, %v233
  %v284 = vpack.c.b16 %v236, %v235
  %v285 = vpack.c.b16 %v238, %v237
  %v286 = vpack.c.b16 %v240, %v239
  %v287 = vpack.c.b16 %v242, %v241
  %v288 = vpack.c.b16 %v244, %v243
  %v289 = vpack.c.b16 %v246, %v245
  %v290 = vpack.c.b16 %v248, %v247
  %v291 = vpack.c.b16 %v250, %v249
  %v292 = vpack.c.b16 %v252, %v251
  %v293 = vpack.c.b16 %v254, %v253
  %v294 = vpack.c.b16 %v256, %v255
  %v295 = vpack.c.b16 %v258, %v257
  %v296 = vpack.c.b16 %v260, %v259
  %v297 = vpack.c.b16 %v262, %v261
  %v298 = vpack.c.b16 %v264, %v263
  %v299 = vpack.c.b16 %v266, %v265
  %v300 = vpack.c.b16 %v268, %v267
  %333 = vmatprep.subr.bf16.mxu0 0
  %334 = vmatpush1.bf16.msra.mxu0 %v269
  %335 = vmatprep.subr.bf16.mxu0 0
  %336 = vmatpush1.bf16.msra.mxu0 %v270
  %337 = vmatprep.subr.bf16.mxu0 0
  %338 = vmatpush1.bf16.msra.mxu0 %v271
  %339 = vmatprep.subr.bf16.mxu0 0
  %340 = vmatpush1.bf16.msra.mxu0 %v272
  %341 = vmatprep.subr.bf16.mxu0 0
  %342 = vmatpush1.bf16.msra.mxu0 %v273
  %343 = vmatprep.subr.bf16.mxu0 0
  %344 = vmatpush1.bf16.msra.mxu0 %v274
  %345 = vmatprep.subr.bf16.mxu0 0
  %346 = vmatpush1.bf16.msra.mxu0 %v275
  %347 = vmatprep.subr.bf16.mxu0 0
  %348 = vmatpush1.bf16.msra.mxu0 %v276
  %349 = vmatprep.subr.bf16.mxu0 0
  %350 = vmatpush1.bf16.msra.mxu0 %v277
  %351 = vmatprep.subr.bf16.mxu0 0
  %352 = vmatpush1.bf16.msra.mxu0 %v278
  %353 = vmatprep.subr.bf16.mxu0 0
  %354 = vmatpush1.bf16.msra.mxu0 %v279
  %355 = vmatprep.subr.bf16.mxu0 0
  %356 = vmatpush1.bf16.msra.mxu0 %v280
  %357 = vmatprep.subr.bf16.mxu0 0
  %358 = vmatpush1.bf16.msra.mxu0 %v281
  %359 = vmatprep.subr.bf16.mxu0 0
  %360 = vmatpush1.bf16.msra.mxu0 %v282
  %361 = vmatprep.subr.bf16.mxu0 0
  %362 = vmatpush1.bf16.msra.mxu0 %v283
  %363 = vmatprep.subr.bf16.mxu0 0
  %364 = vmatpush1.bf16.msra.mxu0 %v284
  %365 = vmatprep.mubr.bf16.mxu0 %v126
  %366 = vmatmul.mubr.bf16.gmra.mrb[0].mxu0 %v125
  %v367 = vpop.f32.mrb[0].mxu0
  %v368 = vadd.f32 %v100, %v367
  %v369 = vpop.f32.mrb[0].mxu0
  %v370 = vpop.f32.mrb[0].mxu0
  %v371 = vadd.f32 %v100, %v370
  %v372 = vpop.f32.mrb[0].mxu0
  %373 = vmatprep.mubr.bf16.mxu0 %v130
  %374 = vmatmul.mubr.bf16.gmra.mrb[0].mxu0 %v129
  %v375 = vpop.f32.mrb[0].mxu0
  %v376 = vadd.f32 %v100, %v375
  %v377 = vpop.f32.mrb[0].mxu0
  %v378 = vpop.f32.mrb[0].mxu0
  %v379 = vadd.f32 %v100, %v378
  %v380 = vpop.f32.mrb[0].mxu0
  %381 = vdwg.mxu0
  %382 = vmatprep.subr.bf16.mxu0 0
  %383 = vmatpush1.bf16.msra.mxu0 %v285
  %384 = vmatprep.subr.bf16.mxu0 0
  %385 = vmatpush1.bf16.msra.mxu0 %v286
  %386 = vmatprep.subr.bf16.mxu0 0
  %387 = vmatpush1.bf16.msra.mxu0 %v287
  %388 = vmatprep.subr.bf16.mxu0 0
  %389 = vmatpush1.bf16.msra.mxu0 %v288
  %390 = vmatprep.subr.bf16.mxu0 0
  %391 = vmatpush1.bf16.msra.mxu0 %v289
  %392 = vmatprep.subr.bf16.mxu0 0
  %393 = vmatpush1.bf16.msra.mxu0 %v290
  %394 = vmatprep.subr.bf16.mxu0 0
  %395 = vmatpush1.bf16.msra.mxu0 %v291
  %396 = vmatprep.subr.bf16.mxu0 0
  %397 = vmatpush1.bf16.msra.mxu0 %v292
  %398 = vmatprep.subr.bf16.mxu0 0
  %399 = vmatpush1.bf16.msra.mxu0 %v293
  %400 = vmatprep.subr.bf16.mxu0 0
  %401 = vmatpush1.bf16.msra.mxu0 %v294
  %402 = vmatprep.subr.bf16.mxu0 0
  %403 = vmatpush1.bf16.msra.mxu0 %v295
  %404 = vmatprep.subr.bf16.mxu0 0
  %405 = vmatpush1.bf16.msra.mxu0 %v296
  %406 = vmatprep.subr.bf16.mxu0 0
  %407 = vmatpush1.bf16.msra.mxu0 %v297
  %408 = vmatprep.subr.bf16.mxu0 0
  %409 = vmatpush1.bf16.msra.mxu0 %v298
  %410 = vmatprep.subr.bf16.mxu0 0
  %411 = vmatpush1.bf16.msra.mxu0 %v299
  %412 = vmatprep.subr.bf16.mxu0 0
  %413 = vmatpush1.bf16.msra.mxu0 %v300
  %414 = vmatprep.mubr.bf16.mxu0 %v128
  %415 = vmatmul.mubr.bf16.gmra.mrb[0].mxu0 %v127
  %v416 = vpop.f32.mrb[0].mxu0
  %v417 = vadd.f32 %v368, %v416
  %v418 = vpop.f32.mrb[0].mxu0
  %v419 = vpop.f32.mrb[0].mxu0
  %v420 = vadd.f32 %v371, %v419
  %v421 = vpop.f32.mrb[0].mxu0
  %422 = vmatprep.mubr.bf16.mxu0 %v132
  %423 = vmatmul.mubr.bf16.gmra.mrb[0].mxu0 %v131
  %v424 = vpop.f32.mrb[0].mxu0
  %v425 = vadd.f32 %v376, %v424
  %v426 = vpop.f32.mrb[0].mxu0
  %v427 = vpop.f32.mrb[0].mxu0
  %v428 = vadd.f32 %v379, %v427
  %v429 = vpop.f32.mrb[0].mxu0
  %430 = vdwg.mxu0
  %432 = vset.pattern.permute.xlu0 8
  %433 = vperm.xlu0 %432, %v19
  %v434 = vpop.permute.xlu0 %433
  %437 = vset.pattern.permute.xlu0 8
  %438 = vperm.xlu0 %437, %v20
  %v439 = vpop.permute.xlu0 %438
  %442 = vset.pattern.permute.xlu0 8
  %443 = vperm.xlu0 %442, %v21
  %v444 = vpop.permute.xlu0 %443
  %447 = vset.pattern.permute.xlu0 8
  %448 = vperm.xlu0 %447, %v22
  %v449 = vpop.permute.xlu0 %448
  %v451 = vmul.f32 %v434, %v417
  %v452 = vmul.f32 %v439, %v420
  %v453 = vmul.f32 %v444, %v425
  %v454 = vmul.f32 %v449, %v428
  %v455 = vld [vmem:[%s2 + $0x140] sm:$0xf]
  %vm456 = vcmask 64512
  %v458 = vsel %vm456, %v23, 0
  %v461 = vsel %vm456, %v24, 0
  %vm463 = vcmask 1043456
  %v465 = vsel %vm463, %v455, 0
  %467 = vmatprep.subr.bf16.mxu0 0
  %468 = vmatpush1.bf16.msra.mxu0 %v465
  %469 = vmatprep.subr.bf16.mxu0 0
  %470 = vmatpush1.bf16.msra.mxu0 0
  %471 = vmatprep.subr.bf16.mxu0 0
  %472 = vmatpush1.bf16.msra.mxu0 0
  %473 = vmatprep.subr.bf16.mxu0 0
  %474 = vmatpush1.bf16.msra.mxu0 0
  %475 = vmatprep.subr.bf16.mxu0 0
  %476 = vmatpush1.bf16.msra.mxu0 0
  %477 = vmatprep.subr.bf16.mxu0 0
  %478 = vmatpush1.bf16.msra.mxu0 0
  %479 = vmatprep.subr.bf16.mxu0 0
  %480 = vmatpush1.bf16.msra.mxu0 0
  %481 = vmatprep.subr.bf16.mxu0 0
  %482 = vmatpush1.bf16.msra.mxu0 0
  %483 = vmatprep.subr.bf16.mxu0 0
  %484 = vmatpush1.bf16.msra.mxu0 0
  %485 = vmatprep.subr.bf16.mxu0 0
  %486 = vmatpush1.bf16.msra.mxu0 0
  %487 = vmatprep.subr.bf16.mxu0 0
  %488 = vmatpush1.bf16.msra.mxu0 0
  %489 = vmatprep.subr.bf16.mxu0 0
  %490 = vmatpush1.bf16.msra.mxu0 0
  %491 = vmatprep.subr.bf16.mxu0 0
  %492 = vmatpush1.bf16.msra.mxu0 0
  %493 = vmatprep.subr.bf16.mxu0 0
  %494 = vmatpush1.bf16.msra.mxu0 0
  %495 = vmatprep.subr.bf16.mxu0 0
  %496 = vmatpush1.bf16.msra.mxu0 0
  %497 = vmatprep.subr.bf16.mxu0 0
  %498 = vmatpush1.bf16.msra.mxu0 0
  %499 = vmatprep.mubr.bf16.mxu0 0
  %500 = vmatmul.mubr.bf16.gmra.mrb[0].mxu0 %v458
  %v501 = vpop.f32.mrb[0].mxu0
  %v502 = vadd.f32 0.0, %v501
  %v503 = vpop.f32.mrb[0].mxu0
  %v504 = vpop.f32.mrb[0].mxu0
  %v505 = vadd.f32 0.0, %v504
  %v506 = vpop.f32.mrb[0].mxu0
  %507 = vmatprep.mubr.bf16.mxu0 0
  %508 = vmatmul.mubr.bf16.gmra.mrb[0].mxu0 %v461
  %v509 = vpop.f32.mrb[0].mxu0
  %v510 = vadd.f32 0.0, %v509
  %v511 = vpop.f32.mrb[0].mxu0
  %v512 = vpop.f32.mrb[0].mxu0
  %v513 = vadd.f32 0.0, %v512
  %v514 = vpop.f32.mrb[0].mxu0
  %515 = vdwg.mxu0
  %v516 = vadd.f32 %v451, %v502
  %v517 = vadd.f32 %v452, %v505
  %v518 = vadd.f32 %v453, %v510
  %v519 = vadd.f32 %v454, %v513
  %v520 = vlaneseq
  %v521 = vshrl.u32 %v520, 7
  %v522 = vsub.s32 1, %v521
  %v523 = vrot.slane %v18, %v522
  %v524 = vadd.f32 %v516, %v523
  %v525 = vadd.f32 %v517, %v523
  %v526 = vadd.f32 %v518, %v523
  %v527 = vadd.f32 %v519, %v523
  %vm528 = vcmp.gt.f32.partialorder %v524, 0.0
  %vm529 = vcmp.gt.f32.partialorder %v525, 0.0
  %vm530 = vcmp.gt.f32.partialorder %v526, 0.0
  %vm531 = vcmp.gt.f32.partialorder %v527, 0.0
  %v532 = vmul.f32 %v524, 0.01
  %v533 = vmul.f32 %v525, 0.01
  %v534 = vmul.f32 %v526, 0.01
  %v535 = vmul.f32 %v527, 0.01
  %v536 = vsel %vm528, %v524, %v532
  %v537 = vsel %vm529, %v525, %v533
  %v538 = vsel %vm530, %v526, %v534
  %v539 = vsel %vm531, %v527, %v535
  %v540 = vpack.c.bf16 %v537, %v536
  %v541 = vpack.c.bf16 %v539, %v538
  %v542 = vld [vmem:[%s2 + $0x148] sm:$0xf]
  %v543 = vld [vmem:[%s2 + $0x14c] sm:$0xf]
  %v544 = vld [vmem:[%s2 + $0x150] sm:$0xf]
  %v545 = vld [vmem:[%s2 + $0x154] sm:$0xf]
  %v546 = vlaneseq
  %v547 = vshrl.u32 %v546, 7
  %v548 = vsub.s32 2, %v547
  %v549 = vrot.slane %v18, %v548
  %v554 = vunpack.c.l.b16 %v542
  %v555 = vunpack.c.l.b16 %v543
  %v556 = vunpack.c.l.b16 %v544
  %v557 = vunpack.c.l.b16 %v545
  %v558 = vpack.c.b16 %v555, %v554
  %v559 = vpack.c.b16 %v557, %v556
  %vm562 = vcmask 261120
  %v564 = vsel %vm562, %v540, 0
  %v567 = vsel %vm562, %v541, 0
  %569 = vmatprep.subr.bf16.mxu0 0
  %570 = vmatpush1.bf16.msra.mxu0 %v558
  %571 = vmatprep.subr.bf16.mxu0 0
  %572 = vmatpush1.bf16.msra.mxu0 %v559
  %573 = vmatprep.subr.bf16.mxu0 0
  %574 = vmatpush1.bf16.msra.mxu0 0
  %575 = vmatprep.subr.bf16.mxu0 0
  %576 = vmatpush1.bf16.msra.mxu0 0
  %577 = vmatprep.subr.bf16.mxu0 0
  %578 = vmatpush1.bf16.msra.mxu0 0
  %579 = vmatprep.subr.bf16.mxu0 0
  %580 = vmatpush1.bf16.msra.mxu0 0
  %581 = vmatprep.subr.bf16.mxu0 0
  %582 = vmatpush1.bf16.msra.mxu0 0
  %583 = vmatprep.subr.bf16.mxu0 0
  %584 = vmatpush1.bf16.msra.mxu0 0
  %585 = vmatprep.subr.bf16.mxu0 0
  %586 = vmatpush1.bf16.msra.mxu0 0
  %587 = vmatprep.subr.bf16.mxu0 0
  %588 = vmatpush1.bf16.msra.mxu0 0
  %589 = vmatprep.subr.bf16.mxu0 0
  %590 = vmatpush1.bf16.msra.mxu0 0
  %591 = vmatprep.subr.bf16.mxu0 0
  %592 = vmatpush1.bf16.msra.mxu0 0
  %593 = vmatprep.subr.bf16.mxu0 0
  %594 = vmatpush1.bf16.msra.mxu0 0
  %595 = vmatprep.subr.bf16.mxu0 0
  %596 = vmatpush1.bf16.msra.mxu0 0
  %597 = vmatprep.subr.bf16.mxu0 0
  %598 = vmatpush1.bf16.msra.mxu0 0
  %599 = vmatprep.subr.bf16.mxu0 0
  %600 = vmatpush1.bf16.msra.mxu0 0
  %601 = vmatprep.mubr.bf16.mxu0 0
  %602 = vmatmul.mubr.bf16.gmra.mrb[0].mxu0 %v564
  %v603 = vpop.f32.mrb[0].mxu0
  %v604 = vadd.f32 %v549, %v603
  %v605 = vpop.f32.mrb[0].mxu0
  %v606 = vpop.f32.mrb[0].mxu0
  %v607 = vadd.f32 %v549, %v606
  %v608 = vpop.f32.mrb[0].mxu0
  %609 = vmatprep.mubr.bf16.mxu0 0
  %610 = vmatmul.mubr.bf16.gmra.mrb[0].mxu0 %v567
  %v611 = vpop.f32.mrb[0].mxu0
  %v612 = vadd.f32 %v549, %v611
  %v613 = vpop.f32.mrb[0].mxu0
  %v614 = vpop.f32.mrb[0].mxu0
  %v615 = vadd.f32 %v549, %v614
  %v616 = vpop.f32.mrb[0].mxu0
  %617 = vdwg.mxu0
  %vm618 = vcmp.gt.f32.partialorder %v604, 0.0
  %vm619 = vcmp.gt.f32.partialorder %v607, 0.0
  %vm620 = vcmp.gt.f32.partialorder %v612, 0.0
  %vm621 = vcmp.gt.f32.partialorder %v615, 0.0
  %v622 = vmul.f32 %v604, 0.01
  %v623 = vmul.f32 %v607, 0.01
  %v624 = vmul.f32 %v612, 0.01
  %v625 = vmul.f32 %v615, 0.01
  %v626 = vsel %vm618, %v604, %v622
  %v627 = vsel %vm619, %v607, %v623
  %v628 = vsel %vm620, %v612, %v624
  %v629 = vsel %vm621, %v615, %v625
  %v630 = vld [vmem:[%s2 + $0x100] sm:$0xf]
  %v631 = vld [vmem:[%s2 + $0x104] sm:$0xf]
  %v632 = vld [vmem:[%s2 + $0x108] sm:$0xf]
  %v633 = vld [vmem:[%s2 + $0x10c] sm:$0xf]
  %v634 = vld [vmem:[%s2 + $0x110] sm:$0xf]
  %v635 = vld [vmem:[%s2 + $0x114] sm:$0xf]
  %v636 = vld [vmem:[%s2 + $0x118] sm:$0xf]
  %v637 = vld [vmem:[%s2 + $0x11c] sm:$0xf]
  %v638 = vld [vmem:[%s2 + $0x120] sm:$0xf]
  %v639 = vld [vmem:[%s2 + $0x124] sm:$0xf]
  %v640 = vld [vmem:[%s2 + $0x128] sm:$0xf]
  %v641 = vld [vmem:[%s2 + $0x12c] sm:$0xf]
  %v642 = vld [vmem:[%s2 + $0x130] sm:$0xf]
  %v643 = vld [vmem:[%s2 + $0x134] sm:$0xf]
  %v644 = vld [vmem:[%s2 + $0x138] sm:$0xf]
  %v645 = vld [vmem:[%s2 + $0x13c] sm:$0xf]
  %v646 = vld [vmem:[%s2 + $0x158] sm:$0xf]
  %v647 = vld [vmem:[%s2 + $0x15c] sm:$0xf]
  %v648 = vld [vmem:[%s2 + $0x160] sm:$0xf]
  %v649 = vld [vmem:[%s2 + $0x164] sm:$0xf]
  %v650 = vld [vmem:[%s2 + $0x168] sm:$0xf]
  %v651 = vld [vmem:[%s2 + $0x16c] sm:$0xf]
  %v652 = vld [vmem:[%s2 + $0x170] sm:$0xf]
  %v653 = vld [vmem:[%s2 + $0x174] sm:$0xf]
  %v654 = vpack.c.bf16 %v627, %v626
  %v655 = vpack.c.bf16 %v629, %v628
  %v660 = vunpack.c.l.b16 %v646
  %v661 = vunpack.c.l.b16 %v647
  %v662 = vunpack.c.l.b16 %v648
  %v663 = vunpack.c.l.b16 %v649
  %v664 = vpack.c.b16 %v661, %v660
  %v665 = vpack.c.b16 %v663, %v662
  %v669 = vsel %vm562, %v654, 0
  %v672 = vsel %vm562, %v655, 0
  %674 = vmatprep.subr.bf16.mxu0 0
  %675 = vmatpush1.bf16.msra.mxu0 %v664
  %676 = vmatprep.subr.bf16.mxu0 0
  %677 = vmatpush1.bf16.msra.mxu0 %v665
  %678 = vmatprep.subr.bf16.mxu0 0
  %679 = vmatpush1.bf16.msra.mxu0 0
  %680 = vmatprep.subr.bf16.mxu0 0
  %681 = vmatpush1.bf16.msra.mxu0 0
  %682 = vmatprep.subr.bf16.mxu0 0
  %683 = vmatpush1.bf16.msra.mxu0 0
  %684 = vmatprep.subr.bf16.mxu0 0
  %685 = vmatpush1.bf16.msra.mxu0 0
  %686 = vmatprep.subr.bf16.mxu0 0
  %687 = vmatpush1.bf16.msra.mxu0 0
  %688 = vmatprep.subr.bf16.mxu0 0
  %689 = vmatpush1.bf16.msra.mxu0 0
  %690 = vmatprep.subr.bf16.mxu0 0
  %691 = vmatpush1.bf16.msra.mxu0 0
  %692 = vmatprep.subr.bf16.mxu0 0
  %693 = vmatpush1.bf16.msra.mxu0 0
  %694 = vmatprep.subr.bf16.mxu0 0
  %695 = vmatpush1.bf16.msra.mxu0 0
  %696 = vmatprep.subr.bf16.mxu0 0
  %697 = vmatpush1.bf16.msra.mxu0 0
  %698 = vmatprep.subr.bf16.mxu0 0
  %699 = vmatpush1.bf16.msra.mxu0 0
  %700 = vmatprep.subr.bf16.mxu0 0
  %701 = vmatpush1.bf16.msra.mxu0 0
  %702 = vmatprep.subr.bf16.mxu0 0
  %703 = vmatpush1.bf16.msra.mxu0 0
  %704 = vmatprep.subr.bf16.mxu0 0
  %705 = vmatpush1.bf16.msra.mxu0 0
  %706 = vmatprep.mubr.bf16.mxu0 0
  %707 = vmatmul.mubr.bf16.gmra.mrb[0].mxu0 %v669
  %v708 = vpop.f32.mrb[0].mxu0
  %v709 = vadd.f32 0.0, %v708
  %v710 = vpop.f32.mrb[0].mxu0
  %v711 = vpop.f32.mrb[0].mxu0
  %v712 = vadd.f32 0.0, %v711
  %v713 = vpop.f32.mrb[0].mxu0
  %714 = vmatprep.mubr.bf16.mxu0 0
  %715 = vmatmul.mubr.bf16.gmra.mrb[0].mxu0 %v672
  %v716 = vpop.f32.mrb[0].mxu0
  %v717 = vadd.f32 0.0, %v716
  %v718 = vpop.f32.mrb[0].mxu0
  %v719 = vpop.f32.mrb[0].mxu0
  %v720 = vadd.f32 0.0, %v719
  %v721 = vpop.f32.mrb[0].mxu0
  %722 = vdwg.mxu0
  %v723 = vlaneseq
  %v724 = vshrl.u32 %v723, 7
  %v725 = vsub.s32 3, %v724
  %v726 = vrot.slane %v18, %v725
  %v731 = vunpack.c.l.b16 %v650
  %v732 = vunpack.c.l.b16 %v651
  %v733 = vunpack.c.l.b16 %v652
  %v734 = vunpack.c.l.b16 %v653
  %v735 = vpack.c.b16 %v732, %v731
  %v736 = vpack.c.b16 %v734, %v733
  %739 = vmatprep.subr.bf16.mxu0 0
  %740 = vmatpush1.bf16.msra.mxu0 %v735
  %741 = vmatprep.subr.bf16.mxu0 0
  %742 = vmatpush1.bf16.msra.mxu0 %v736
  %743 = vmatprep.subr.bf16.mxu0 0
  %744 = vmatpush1.bf16.msra.mxu0 0
  %745 = vmatprep.subr.bf16.mxu0 0
  %746 = vmatpush1.bf16.msra.mxu0 0
  %747 = vmatprep.subr.bf16.mxu0 0
  %748 = vmatpush1.bf16.msra.mxu0 0
  %749 = vmatprep.subr.bf16.mxu0 0
  %750 = vmatpush1.bf16.msra.mxu0 0
  %751 = vmatprep.subr.bf16.mxu0 0
  %752 = vmatpush1.bf16.msra.mxu0 0
  %753 = vmatprep.subr.bf16.mxu0 0
  %754 = vmatpush1.bf16.msra.mxu0 0
  %755 = vmatprep.subr.bf16.mxu0 0
  %756 = vmatpush1.bf16.msra.mxu0 0
  %757 = vmatprep.subr.bf16.mxu0 0
  %758 = vmatpush1.bf16.msra.mxu0 0
  %759 = vmatprep.subr.bf16.mxu0 0
  %760 = vmatpush1.bf16.msra.mxu0 0
  %761 = vmatprep.subr.bf16.mxu0 0
  %762 = vmatpush1.bf16.msra.mxu0 0
  %763 = vmatprep.subr.bf16.mxu0 0
  %764 = vmatpush1.bf16.msra.mxu0 0
  %765 = vmatprep.subr.bf16.mxu0 0
  %766 = vmatpush1.bf16.msra.mxu0 0
  %767 = vmatprep.subr.bf16.mxu0 0
  %768 = vmatpush1.bf16.msra.mxu0 0
  %769 = vmatprep.subr.bf16.mxu0 0
  %770 = vmatpush1.bf16.msra.mxu0 0
  %771 = vmatprep.mubr.bf16.mxu0 0
  %772 = vmatmul.mubr.bf16.gmra.mrb[0].mxu0 %v669
  %v773 = vpop.f32.mrb[0].mxu0
  %v774 = vadd.f32 %v726, %v773
  %v775 = vpop.f32.mrb[0].mxu0
  %v776 = vpop.f32.mrb[0].mxu0
  %v777 = vadd.f32 %v726, %v776
  %v778 = vpop.f32.mrb[0].mxu0
  %779 = vmatprep.mubr.bf16.mxu0 0
  %780 = vmatmul.mubr.bf16.gmra.mrb[0].mxu0 %v672
  %v781 = vpop.f32.mrb[0].mxu0
  %v782 = vadd.f32 %v726, %v781
  %v783 = vpop.f32.mrb[0].mxu0
  %v784 = vpop.f32.mrb[0].mxu0
  %v785 = vadd.f32 %v726, %v784
  %v786 = vpop.f32.mrb[0].mxu0
  %787 = vdwg.mxu0
  %v788 = vpack.c.bf16 %v712, %v709
  %v789 = vpack.c.bf16 %v720, %v717
  %v806 = vunpack.c.l.b16 %v630
  %v807 = vunpack.c.l.b16 %v631
  %v808 = vunpack.c.l.b16 %v632
  %v809 = vunpack.c.l.b16 %v633
  %v810 = vunpack.c.l.b16 %v634
  %v811 = vunpack.c.l.b16 %v635
  %v812 = vunpack.c.l.b16 %v636
  %v813 = vunpack.c.l.b16 %v637
  %v814 = vunpack.c.l.b16 %v638
  %v815 = vunpack.c.l.b16 %v639
  %v816 = vunpack.c.l.b16 %v640
  %v817 = vunpack.c.l.b16 %v641
  %v818 = vunpack.c.l.b16 %v642
  %v819 = vunpack.c.l.b16 %v643
  %v820 = vunpack.c.l.b16 %v644
  %v821 = vunpack.c.l.b16 %v645
  %v822 = vpack.c.b16 %v807, %v806
  %v823 = vpack.c.b16 %v809, %v808
  %v824 = vpack.c.b16 %v811, %v810
  %v825 = vpack.c.b16 %v813, %v812
  %v826 = vpack.c.b16 %v815, %v814
  %v827 = vpack.c.b16 %v817, %v816
  %v828 = vpack.c.b16 %v819, %v818
  %v829 = vpack.c.b16 %v821, %v820
  %v831 = vsel %vm562, %v822, 0
  %v834 = vsel %vm562, %v823, 0
  %v837 = vsel %vm562, %v824, 0
  %v840 = vsel %vm562, %v825, 0
  %v843 = vsel %vm562, %v826, 0
  %v846 = vsel %vm562, %v827, 0
  %v849 = vsel %vm562, %v828, 0
  %v852 = vsel %vm562, %v829, 0
  %854 = vmatprep.subr.bf16.mxu0 0
  %855 = vmatpush1.bf16.msra.mxu0 %v788
  %856 = vmatprep.subr.bf16.mxu0 0
  %857 = vmatpush1.bf16.msra.mxu0 %v789
  %858 = vmatprep.subr.bf16.mxu0 0
  %859 = vmatpush1.bf16.msra.mxu0 0
  %860 = vmatprep.subr.bf16.mxu0 0
  %861 = vmatpush1.bf16.msra.mxu0 0
  %862 = vmatprep.subr.bf16.mxu0 0
  %863 = vmatpush1.bf16.msra.mxu0 0
  %864 = vmatprep.subr.bf16.mxu0 0
  %865 = vmatpush1.bf16.msra.mxu0 0
  %866 = vmatprep.subr.bf16.mxu0 0
  %867 = vmatpush1.bf16.msra.mxu0 0
  %868 = vmatprep.subr.bf16.mxu0 0
  %869 = vmatpush1.bf16.msra.mxu0 0
  %870 = vmatprep.subr.bf16.mxu0 0
  %871 = vmatpush1.bf16.msra.mxu0 0
  %872 = vmatprep.subr.bf16.mxu0 0
  %873 = vmatpush1.bf16.msra.mxu0 0
  %874 = vmatprep.subr.bf16.mxu0 0
  %875 = vmatpush1.bf16.msra.mxu0 0
  %876 = vmatprep.subr.bf16.mxu0 0
  %877 = vmatpush1.bf16.msra.mxu0 0
  %878 = vmatprep.subr.bf16.mxu0 0
  %879 = vmatpush1.bf16.msra.mxu0 0
  %880 = vmatprep.subr.bf16.mxu0 0
  %881 = vmatpush1.bf16.msra.mxu0 0
  %882 = vmatprep.subr.bf16.mxu0 0
  %883 = vmatpush1.bf16.msra.mxu0 0
  %884 = vmatprep.subr.bf16.mxu0 0
  %885 = vmatpush1.bf16.msra.mxu0 0
  %886 = vmatprep.mubr.bf16.mxu0 0
  %887 = vmatmul.mubr.bf16.gmra.mrb[0].mxu0 %v831
  %v888 = vpop.f32.mrb[0].mxu0
  %v889 = vadd.f32 0.0, %v888
  %v890 = vpop.f32.mrb[0].mxu0
  %v891 = vpop.f32.mrb[0].mxu0
  %v892 = vadd.f32 0.0, %v891
  %v893 = vpop.f32.mrb[0].mxu0
  %894 = vmatprep.mubr.bf16.mxu0 0
  %895 = vmatmul.mubr.bf16.gmra.mrb[0].mxu0 %v834
  %v896 = vpop.f32.mrb[0].mxu0
  %v897 = vadd.f32 0.0, %v896
  %v898 = vpop.f32.mrb[0].mxu0
  %v899 = vpop.f32.mrb[0].mxu0
  %v900 = vadd.f32 0.0, %v899
  %v901 = vpop.f32.mrb[0].mxu0
  %902 = vmatprep.mubr.bf16.mxu0 0
  %903 = vmatmul.mubr.bf16.gmra.mrb[0].mxu0 %v837
  %v904 = vpop.f32.mrb[0].mxu0
  %v905 = vadd.f32 0.0, %v904
  %v906 = vpop.f32.mrb[0].mxu0
  %v907 = vpop.f32.mrb[0].mxu0
  %v908 = vadd.f32 0.0, %v907
  %v909 = vpop.f32.mrb[0].mxu0
  %910 = vmatprep.mubr.bf16.mxu0 0
  %911 = vmatmul.mubr.bf16.gmra.mrb[0].mxu0 %v840
  %v912 = vpop.f32.mrb[0].mxu0
  %v913 = vadd.f32 0.0, %v912
  %v914 = vpop.f32.mrb[0].mxu0
  %v915 = vpop.f32.mrb[0].mxu0
  %v916 = vadd.f32 0.0, %v915
  %v917 = vpop.f32.mrb[0].mxu0
  %918 = vmatprep.mubr.bf16.mxu0 0
  %919 = vmatmul.mubr.bf16.gmra.mrb[0].mxu0 %v843
  %v920 = vpop.f32.mrb[0].mxu0
  %v921 = vadd.f32 0.0, %v920
  %v922 = vpop.f32.mrb[0].mxu0
  %v923 = vpop.f32.mrb[0].mxu0
  %v924 = vadd.f32 0.0, %v923
  %v925 = vpop.f32.mrb[0].mxu0
  %926 = vmatprep.mubr.bf16.mxu0 0
  %927 = vmatmul.mubr.bf16.gmra.mrb[0].mxu0 %v846
  %v928 = vpop.f32.mrb[0].mxu0
  %v929 = vadd.f32 0.0, %v928
  %v930 = vpop.f32.mrb[0].mxu0
  %v931 = vpop.f32.mrb[0].mxu0
  %v932 = vadd.f32 0.0, %v931
  %v933 = vpop.f32.mrb[0].mxu0
  %934 = vmatprep.mubr.bf16.mxu0 0
  %935 = vmatmul.mubr.bf16.gmra.mrb[0].mxu0 %v849
  %v936 = vpop.f32.mrb[0].mxu0
  %v937 = vadd.f32 0.0, %v936
  %v938 = vpop.f32.mrb[0].mxu0
  %v939 = vpop.f32.mrb[0].mxu0
  %v940 = vadd.f32 0.0, %v939
  %v941 = vpop.f32.mrb[0].mxu0
  %942 = vmatprep.mubr.bf16.mxu0 0
  %943 = vmatmul.mubr.bf16.gmra.mrb[0].mxu0 %v852
  %v944 = vpop.f32.mrb[0].mxu0
  %v945 = vadd.f32 0.0, %v944
  %v946 = vpop.f32.mrb[0].mxu0
  %v947 = vpop.f32.mrb[0].mxu0
  %v948 = vadd.f32 0.0, %v947
  %v949 = vpop.f32.mrb[0].mxu0
  %950 = vdwg.mxu0
  %v951 = vmax.f32 %v889, %v905
  %v952 = vmax.f32 %v892, %v908
  %v953 = vmax.f32 %v897, %v913
  %v954 = vmax.f32 %v900, %v916
  %v955 = vmax.f32 %v951, %v921
  %v956 = vmax.f32 %v952, %v924
  %v957 = vmax.f32 %v953, %v929
  %v958 = vmax.f32 %v954, %v932
  %v959 = vmax.f32 %v955, %v937
  %v960 = vmax.f32 %v956, %v940
  %v961 = vmax.f32 %v957, %v945
  %v962 = vmax.f32 %v958, %v948
  %v963 = vadd.f32 %v959, %v774
  %v964 = vadd.f32 %v960, %v777
  %v965 = vadd.f32 %v961, %v782
  %v966 = vadd.f32 %v962, %v785
  %vm967 = vcmp.gt.f32.partialorder %v963, 0.0
  %vm968 = vcmp.gt.f32.partialorder %v964, 0.0
  %vm969 = vcmp.gt.f32.partialorder %v965, 0.0
  %vm970 = vcmp.gt.f32.partialorder %v966, 0.0
  %v971 = vmul.f32 %v963, 0.2
  %v972 = vmul.f32 %v964, 0.2
  %v973 = vmul.f32 %v965, 0.2
  %v974 = vmul.f32 %v966, 0.2
  %v975 = vsel %vm967, %v963, %v971
  %v976 = vsel %vm968, %v964, %v972
  %v977 = vsel %vm969, %v965, %v973
  %v978 = vsel %vm970, %v966, %v974
  %v979 = vld [vmem:[%s2 + $0x178] sm:$0xf]
  %v980 = vld [vmem:[%s2 + $0x17c] sm:$0xf]
  %v981 = vld [vmem:[%s2 + $0x180] sm:$0xf]
  %v982 = vld [vmem:[%s2 + $0x184] sm:$0xf]
  %v983 = vld [vmem:[%s2 + $0x188] sm:$0xf]
  %v984 = vld [vmem:[%s2 + $0x18c] sm:$0xf]
  %v985 = vld [vmem:[%s2 + $0x190] sm:$0xf]
  %v986 = vld [vmem:[%s2 + $0x194] sm:$0xf]
  %v987 = vpack.c.bf16 %v976, %v975
  %v988 = vpack.c.bf16 %v978, %v977
  %v993 = vunpack.c.l.b16 %v979
  %v994 = vunpack.c.l.b16 %v980
  %v995 = vunpack.c.l.b16 %v981
  %v996 = vunpack.c.l.b16 %v982
  %v997 = vpack.c.b16 %v994, %v993
  %v998 = vpack.c.b16 %v996, %v995
  %v1002 = vsel %vm562, %v987, 0
  %v1005 = vsel %vm562, %v988, 0
  %1007 = vmatprep.subr.bf16.mxu0 0
  %1008 = vmatpush1.bf16.msra.mxu0 %v997
  %1009 = vmatprep.subr.bf16.mxu0 0
  %1010 = vmatpush1.bf16.msra.mxu0 %v998
  %1011 = vmatprep.subr.bf16.mxu0 0
  %1012 = vmatpush1.bf16.msra.mxu0 0
  %1013 = vmatprep.subr.bf16.mxu0 0
  %1014 = vmatpush1.bf16.msra.mxu0 0
  %1015 = vmatprep.subr.bf16.mxu0 0
  %1016 = vmatpush1.bf16.msra.mxu0 0
  %1017 = vmatprep.subr.bf16.mxu0 0
  %1018 = vmatpush1.bf16.msra.mxu0 0
  %1019 = vmatprep.subr.bf16.mxu0 0
  %1020 = vmatpush1.bf16.msra.mxu0 0
  %1021 = vmatprep.subr.bf16.mxu0 0
  %1022 = vmatpush1.bf16.msra.mxu0 0
  %1023 = vmatprep.subr.bf16.mxu0 0
  %1024 = vmatpush1.bf16.msra.mxu0 0
  %1025 = vmatprep.subr.bf16.mxu0 0
  %1026 = vmatpush1.bf16.msra.mxu0 0
  %1027 = vmatprep.subr.bf16.mxu0 0
  %1028 = vmatpush1.bf16.msra.mxu0 0
  %1029 = vmatprep.subr.bf16.mxu0 0
  %1030 = vmatpush1.bf16.msra.mxu0 0
  %1031 = vmatprep.subr.bf16.mxu0 0
  %1032 = vmatpush1.bf16.msra.mxu0 0
  %1033 = vmatprep.subr.bf16.mxu0 0
  %1034 = vmatpush1.bf16.msra.mxu0 0
  %1035 = vmatprep.subr.bf16.mxu0 0
  %1036 = vmatpush1.bf16.msra.mxu0 0
  %1037 = vmatprep.subr.bf16.mxu0 0
  %1038 = vmatpush1.bf16.msra.mxu0 0
  %1039 = vmatprep.mubr.bf16.mxu0 0
  %1040 = vmatmul.mubr.bf16.gmra.mrb[0].mxu0 %v1002
  %v1041 = vpop.f32.mrb[0].mxu0
  %v1042 = vadd.f32 0.0, %v1041
  %v1043 = vpop.f32.mrb[0].mxu0
  %v1044 = vpop.f32.mrb[0].mxu0
  %v1045 = vadd.f32 0.0, %v1044
  %v1046 = vpop.f32.mrb[0].mxu0
  %1047 = vmatprep.mubr.bf16.mxu0 0
  %1048 = vmatmul.mubr.bf16.gmra.mrb[0].mxu0 %v1005
  %v1049 = vpop.f32.mrb[0].mxu0
  %v1050 = vadd.f32 0.0, %v1049
  %v1051 = vpop.f32.mrb[0].mxu0
  %v1052 = vpop.f32.mrb[0].mxu0
  %v1053 = vadd.f32 0.0, %v1052
  %v1054 = vpop.f32.mrb[0].mxu0
  %1055 = vdwg.mxu0
  %v1056 = vlaneseq
  %v1057 = vshrl.u32 %v1056, 7
  %v1058 = vsub.s32 4, %v1057
  %v1059 = vrot.slane %v18, %v1058
  %v1064 = vunpack.c.l.b16 %v983
  %v1065 = vunpack.c.l.b16 %v984
  %v1066 = vunpack.c.l.b16 %v985
  %v1067 = vunpack.c.l.b16 %v986
  %v1068 = vpack.c.b16 %v1065, %v1064
  %v1069 = vpack.c.b16 %v1067, %v1066
  %1072 = vmatprep.subr.bf16.mxu0 0
  %1073 = vmatpush1.bf16.msra.mxu0 %v1068
  %1074 = vmatprep.subr.bf16.mxu0 0
  %1075 = vmatpush1.bf16.msra.mxu0 %v1069
  %1076 = vmatprep.subr.bf16.mxu0 0
  %1077 = vmatpush1.bf16.msra.mxu0 0
  %1078 = vmatprep.subr.bf16.mxu0 0
  %1079 = vmatpush1.bf16.msra.mxu0 0
  %1080 = vmatprep.subr.bf16.mxu0 0
  %1081 = vmatpush1.bf16.msra.mxu0 0
  %1082 = vmatprep.subr.bf16.mxu0 0
  %1083 = vmatpush1.bf16.msra.mxu0 0
  %1084 = vmatprep.subr.bf16.mxu0 0
  %1085 = vmatpush1.bf16.msra.mxu0 0
  %1086 = vmatprep.subr.bf16.mxu0 0
  %1087 = vmatpush1.bf16.msra.mxu0 0
  %1088 = vmatprep.subr.bf16.mxu0 0
  %1089 = vmatpush1.bf16.msra.mxu0 0
  %1090 = vmatprep.subr.bf16.mxu0 0
  %1091 = vmatpush1.bf16.msra.mxu0 0
  %1092 = vmatprep.subr.bf16.mxu0 0
  %1093 = vmatpush1.bf16.msra.mxu0 0
  %1094 = vmatprep.subr.bf16.mxu0 0
  %1095 = vmatpush1.bf16.msra.mxu0 0
  %1096 = vmatprep.subr.bf16.mxu0 0
  %1097 = vmatpush1.bf16.msra.mxu0 0
  %1098 = vmatprep.subr.bf16.mxu0 0
  %1099 = vmatpush1.bf16.msra.mxu0 0
  %1100 = vmatprep.subr.bf16.mxu0 0
  %1101 = vmatpush1.bf16.msra.mxu0 0
  %1102 = vmatprep.subr.bf16.mxu0 0
  %1103 = vmatpush1.bf16.msra.mxu0 0
  %1104 = vmatprep.mubr.bf16.mxu0 0
  %1105 = vmatmul.mubr.bf16.gmra.mrb[0].mxu0 %v1002
  %v1106 = vpop.f32.mrb[0].mxu0
  %v1107 = vadd.f32 %v1059, %v1106
  %v1108 = vpop.f32.mrb[0].mxu0
  %v1109 = vpop.f32.mrb[0].mxu0
  %v1110 = vadd.f32 %v1059, %v1109
  %v1111 = vpop.f32.mrb[0].mxu0
  %1112 = vmatprep.mubr.bf16.mxu0 0
  %1113 = vmatmul.mubr.bf16.gmra.mrb[0].mxu0 %v1005
  %v1114 = vpop.f32.mrb[0].mxu0
  %v1115 = vadd.f32 %v1059, %v1114
  %v1116 = vpop.f32.mrb[0].mxu0
  %v1117 = vpop.f32.mrb[0].mxu0
  %v1118 = vadd.f32 %v1059, %v1117
  %v1119 = vpop.f32.mrb[0].mxu0
  %1120 = vdwg.mxu0
  %v1121 = vpack.c.bf16 %v1045, %v1042
  %v1122 = vpack.c.bf16 %v1053, %v1050
  %1123 = vmatprep.subr.bf16.mxu0 0
  %1124 = vmatpush1.bf16.msra.mxu0 %v1121
  %1125 = vmatprep.subr.bf16.mxu0 0
  %1126 = vmatpush1.bf16.msra.mxu0 %v1122
  %1127 = vmatprep.subr.bf16.mxu0 0
  %1128 = vmatpush1.bf16.msra.mxu0 0
  %1129 = vmatprep.subr.bf16.mxu0 0
  %1130 = vmatpush1.bf16.msra.mxu0 0
  %1131 = vmatprep.subr.bf16.mxu0 0
  %1132 = vmatpush1.bf16.msra.mxu0 0
  %1133 = vmatprep.subr.bf16.mxu0 0
  %1134 = vmatpush1.bf16.msra.mxu0 0
  %1135 = vmatprep.subr.bf16.mxu0 0
  %1136 = vmatpush1.bf16.msra.mxu0 0
  %1137 = vmatprep.subr.bf16.mxu0 0
  %1138 = vmatpush1.bf16.msra.mxu0 0
  %1139 = vmatprep.subr.bf16.mxu0 0
  %1140 = vmatpush1.bf16.msra.mxu0 0
  %1141 = vmatprep.subr.bf16.mxu0 0
  %1142 = vmatpush1.bf16.msra.mxu0 0
  %1143 = vmatprep.subr.bf16.mxu0 0
  %1144 = vmatpush1.bf16.msra.mxu0 0
  %1145 = vmatprep.subr.bf16.mxu0 0
  %1146 = vmatpush1.bf16.msra.mxu0 0
  %1147 = vmatprep.subr.bf16.mxu0 0
  %1148 = vmatpush1.bf16.msra.mxu0 0
  %1149 = vmatprep.subr.bf16.mxu0 0
  %1150 = vmatpush1.bf16.msra.mxu0 0
  %1151 = vmatprep.subr.bf16.mxu0 0
  %1152 = vmatpush1.bf16.msra.mxu0 0
  %1153 = vmatprep.subr.bf16.mxu0 0
  %1154 = vmatpush1.bf16.msra.mxu0 0
  %1155 = vmatprep.mubr.bf16.mxu0 0
  %1156 = vmatmul.mubr.bf16.gmra.mrb[0].mxu0 %v831
  %v1157 = vpop.f32.mrb[0].mxu0
  %v1158 = vadd.f32 0.0, %v1157
  %v1159 = vpop.f32.mrb[0].mxu0
  %v1160 = vpop.f32.mrb[0].mxu0
  %v1161 = vadd.f32 0.0, %v1160
  %v1162 = vpop.f32.mrb[0].mxu0
  %1163 = vmatprep.mubr.bf16.mxu0 0
  %1164 = vmatmul.mubr.bf16.gmra.mrb[0].mxu0 %v834
  %v1165 = vpop.f32.mrb[0].mxu0
  %v1166 = vadd.f32 0.0, %v1165
  %v1167 = vpop.f32.mrb[0].mxu0
  %v1168 = vpop.f32.mrb[0].mxu0
  %v1169 = vadd.f32 0.0, %v1168
  %v1170 = vpop.f32.mrb[0].mxu0
  %1171 = vmatprep.mubr.bf16.mxu0 0
  %1172 = vmatmul.mubr.bf16.gmra.mrb[0].mxu0 %v837
  %v1173 = vpop.f32.mrb[0].mxu0
  %v1174 = vadd.f32 0.0, %v1173
  %v1175 = vpop.f32.mrb[0].mxu0
  %v1176 = vpop.f32.mrb[0].mxu0
  %v1177 = vadd.f32 0.0, %v1176
  %v1178 = vpop.f32.mrb[0].mxu0
  %1179 = vmatprep.mubr.bf16.mxu0 0
  %1180 = vmatmul.mubr.bf16.gmra.mrb[0].mxu0 %v840
  %v1181 = vpop.f32.mrb[0].mxu0
  %v1182 = vadd.f32 0.0, %v1181
  %v1183 = vpop.f32.mrb[0].mxu0
  %v1184 = vpop.f32.mrb[0].mxu0
  %v1185 = vadd.f32 0.0, %v1184
  %v1186 = vpop.f32.mrb[0].mxu0
  %1187 = vmatprep.mubr.bf16.mxu0 0
  %1188 = vmatmul.mubr.bf16.gmra.mrb[0].mxu0 %v843
  %v1189 = vpop.f32.mrb[0].mxu0
  %v1190 = vadd.f32 0.0, %v1189
  %v1191 = vpop.f32.mrb[0].mxu0
  %v1192 = vpop.f32.mrb[0].mxu0
  %v1193 = vadd.f32 0.0, %v1192
  %v1194 = vpop.f32.mrb[0].mxu0
  %1195 = vmatprep.mubr.bf16.mxu0 0
  %1196 = vmatmul.mubr.bf16.gmra.mrb[0].mxu0 %v846
  %v1197 = vpop.f32.mrb[0].mxu0
  %v1198 = vadd.f32 0.0, %v1197
  %v1199 = vpop.f32.mrb[0].mxu0
  %v1200 = vpop.f32.mrb[0].mxu0
  %v1201 = vadd.f32 0.0, %v1200
  %v1202 = vpop.f32.mrb[0].mxu0
  %1203 = vmatprep.mubr.bf16.mxu0 0
  %1204 = vmatmul.mubr.bf16.gmra.mrb[0].mxu0 %v849
  %v1205 = vpop.f32.mrb[0].mxu0
  %v1206 = vadd.f32 0.0, %v1205
  %v1207 = vpop.f32.mrb[0].mxu0
  %v1208 = vpop.f32.mrb[0].mxu0
  %v1209 = vadd.f32 0.0, %v1208
  %v1210 = vpop.f32.mrb[0].mxu0
  %1211 = vmatprep.mubr.bf16.mxu0 0
  %1212 = vmatmul.mubr.bf16.gmra.mrb[0].mxu0 %v852
  %v1213 = vpop.f32.mrb[0].mxu0
  %v1214 = vadd.f32 0.0, %v1213
  %v1215 = vpop.f32.mrb[0].mxu0
  %v1216 = vpop.f32.mrb[0].mxu0
  %v1217 = vadd.f32 0.0, %v1216
  %v1218 = vpop.f32.mrb[0].mxu0
  %1219 = vdwg.mxu0
  %v1220 = vmax.f32 %v1158, %v1174
  %v1221 = vmax.f32 %v1161, %v1177
  %v1222 = vmax.f32 %v1166, %v1182
  %v1223 = vmax.f32 %v1169, %v1185
  %v1224 = vmax.f32 %v1220, %v1190
  %v1225 = vmax.f32 %v1221, %v1193
  %v1226 = vmax.f32 %v1222, %v1198
  %v1227 = vmax.f32 %v1223, %v1201
  %v1228 = vmax.f32 %v1224, %v1206
  %v1229 = vmax.f32 %v1225, %v1209
  %v1230 = vmax.f32 %v1226, %v1214
  %v1231 = vmax.f32 %v1227, %v1217
  %v1232 = vadd.f32 %v1228, %v1107
  %v1233 = vadd.f32 %v1229, %v1110
  %v1234 = vadd.f32 %v1230, %v1115
  %v1235 = vadd.f32 %v1231, %v1118
  %vm1236 = vcmp.gt.f32.partialorder %v1232, 0.0
  %vm1237 = vcmp.gt.f32.partialorder %v1233, 0.0
  %vm1238 = vcmp.gt.f32.partialorder %v1234, 0.0
  %vm1239 = vcmp.gt.f32.partialorder %v1235, 0.0
  %v1240 = vmul.f32 %v1232, 0.2
  %v1241 = vmul.f32 %v1233, 0.2
  %v1242 = vmul.f32 %v1234, 0.2
  %v1243 = vmul.f32 %v1235, 0.2
  %v1244 = vsel %vm1236, %v1232, %v1240
  %v1245 = vsel %vm1237, %v1233, %v1241
  %v1246 = vsel %vm1238, %v1234, %v1242
  %v1247 = vsel %vm1239, %v1235, %v1243
  %v1248 = vpack.c.bf16 %v1245, %v1244
  %v1249 = vpack.c.bf16 %v1247, %v1246
  %v1250 = vld [vmem:[%s2 + $0x198] sm:$0xf]
  %v1251 = vld [vmem:[%s2 + $0x19c] sm:$0xf]
  %v1252 = vld [vmem:[%s2 + $0x1a0] sm:$0xf]
  %v1253 = vld [vmem:[%s2 + $0x1a4] sm:$0xf]
  %v1254 = vlaneseq
  %v1255 = vshrl.u32 %v1254, 7
  %v1256 = vsub.s32 5, %v1255
  %v1257 = vrot.slane %v18, %v1256
  %v1262 = vunpack.c.l.b16 %v1250
  %v1263 = vunpack.c.l.b16 %v1251
  %v1264 = vunpack.c.l.b16 %v1252
  %v1265 = vunpack.c.l.b16 %v1253
  %v1266 = vpack.c.b16 %v1263, %v1262
  %v1267 = vpack.c.b16 %v1265, %v1264
  %v1271 = vsel %vm562, %v1248, 0
  %v1274 = vsel %vm562, %v1249, 0
  %1276 = vmatprep.subr.bf16.mxu0 0
  %1277 = vmatpush1.bf16.msra.mxu0 %v1266
  %1278 = vmatprep.subr.bf16.mxu0 0
  %1279 = vmatpush1.bf16.msra.mxu0 %v1267
  %1280 = vmatprep.subr.bf16.mxu0 0
  %1281 = vmatpush1.bf16.msra.mxu0 0
  %1282 = vmatprep.subr.bf16.mxu0 0
  %1283 = vmatpush1.bf16.msra.mxu0 0
  %1284 = vmatprep.subr.bf16.mxu0 0
  %1285 = vmatpush1.bf16.msra.mxu0 0
  %1286 = vmatprep.subr.bf16.mxu0 0
  %1287 = vmatpush1.bf16.msra.mxu0 0
  %1288 = vmatprep.subr.bf16.mxu0 0
  %1289 = vmatpush1.bf16.msra.mxu0 0
  %1290 = vmatprep.subr.bf16.mxu0 0
  %1291 = vmatpush1.bf16.msra.mxu0 0
  %1292 = vmatprep.subr.bf16.mxu0 0
  %1293 = vmatpush1.bf16.msra.mxu0 0
  %1294 = vmatprep.subr.bf16.mxu0 0
  %1295 = vmatpush1.bf16.msra.mxu0 0
  %1296 = vmatprep.subr.bf16.mxu0 0
  %1297 = vmatpush1.bf16.msra.mxu0 0
  %1298 = vmatprep.subr.bf16.mxu0 0
  %1299 = vmatpush1.bf16.msra.mxu0 0
  %1300 = vmatprep.subr.bf16.mxu0 0
  %1301 = vmatpush1.bf16.msra.mxu0 0
  %1302 = vmatprep.subr.bf16.mxu0 0
  %1303 = vmatpush1.bf16.msra.mxu0 0
  %1304 = vmatprep.subr.bf16.mxu0 0
  %1305 = vmatpush1.bf16.msra.mxu0 0
  %1306 = vmatprep.subr.bf16.mxu0 0
  %1307 = vmatpush1.bf16.msra.mxu0 0
  %1308 = vmatprep.mubr.bf16.mxu0 0
  %1309 = vmatmul.mubr.bf16.gmra.mrb[0].mxu0 %v1271
  %v1310 = vpop.f32.mrb[0].mxu0
  %v1311 = vadd.f32 %v1257, %v1310
  %v1312 = vpop.f32.mrb[0].mxu0
  %v1313 = vpop.f32.mrb[0].mxu0
  %v1314 = vadd.f32 %v1257, %v1313
  %v1315 = vpop.f32.mrb[0].mxu0
  %1316 = vmatprep.mubr.bf16.mxu0 0
  %1317 = vmatmul.mubr.bf16.gmra.mrb[0].mxu0 %v1274
  %v1318 = vpop.f32.mrb[0].mxu0
  %v1319 = vadd.f32 %v1257, %v1318
  %v1320 = vpop.f32.mrb[0].mxu0
  %v1321 = vpop.f32.mrb[0].mxu0
  %v1322 = vadd.f32 %v1257, %v1321
  %v1323 = vpop.f32.mrb[0].mxu0
  %1324 = vdwg.mxu0
  %vm1325 = vcmp.gt.f32.partialorder %v1311, 0.0
  %vm1326 = vcmp.gt.f32.partialorder %v1314, 0.0
  %vm1327 = vcmp.gt.f32.partialorder %v1319, 0.0
  %vm1328 = vcmp.gt.f32.partialorder %v1322, 0.0
  %v1329 = vmul.f32 %v1311, 0.01
  %v1330 = vmul.f32 %v1314, 0.01
  %v1331 = vmul.f32 %v1319, 0.01
  %v1332 = vmul.f32 %v1322, 0.01
  %v1333 = vsel %vm1325, %v1311, %v1329
  %v1334 = vsel %vm1326, %v1314, %v1330
  %v1335 = vsel %vm1327, %v1319, %v1331
  %v1336 = vsel %vm1328, %v1322, %v1332
  %v1337 = vpack.c.bf16 %v1334, %v1333
  %v1338 = vpack.c.bf16 %v1336, %v1335
  %v1339 = vld [vmem:[%s2 + $0x1a8] sm:$0xf]
  %v1340 = vld [vmem:[%s2 + $0x1ac] sm:$0xf]
  %v1341 = vld [vmem:[%s2 + $0x1b0] sm:$0xf]
  %v1342 = vld [vmem:[%s2 + $0x1b4] sm:$0xf]
  %v1343 = vlaneseq
  %v1344 = vshrl.u32 %v1343, 7
  %v1345 = vsub.s32 6, %v1344
  %v1346 = vrot.slane %v18, %v1345
  %v1351 = vunpack.c.l.b16 %v1339
  %v1352 = vunpack.c.l.b16 %v1340
  %v1353 = vunpack.c.l.b16 %v1341
  %v1354 = vunpack.c.l.b16 %v1342
  %v1355 = vpack.c.b16 %v1352, %v1351
  %v1356 = vpack.c.b16 %v1354, %v1353
  %v1360 = vsel %vm562, %v1337, 0
  %v1363 = vsel %vm562, %v1338, 0
  %1365 = vmatprep.subr.bf16.mxu0 0
  %1366 = vmatpush1.bf16.msra.mxu0 %v1355
  %1367 = vmatprep.subr.bf16.mxu0 0
  %1368 = vmatpush1.bf16.msra.mxu0 %v1356
  %1369 = vmatprep.subr.bf16.mxu0 0
  %1370 = vmatpush1.bf16.msra.mxu0 0
  %1371 = vmatprep.subr.bf16.mxu0 0
  %1372 = vmatpush1.bf16.msra.mxu0 0
  %1373 = vmatprep.subr.bf16.mxu0 0
  %1374 = vmatpush1.bf16.msra.mxu0 0
  %1375 = vmatprep.subr.bf16.mxu0 0
  %1376 = vmatpush1.bf16.msra.mxu0 0
  %1377 = vmatprep.subr.bf16.mxu0 0
  %1378 = vmatpush1.bf16.msra.mxu0 0
  %1379 = vmatprep.subr.bf16.mxu0 0
  %1380 = vmatpush1.bf16.msra.mxu0 0
  %1381 = vmatprep.subr.bf16.mxu0 0
  %1382 = vmatpush1.bf16.msra.mxu0 0
  %1383 = vmatprep.subr.bf16.mxu0 0
  %1384 = vmatpush1.bf16.msra.mxu0 0
  %1385 = vmatprep.subr.bf16.mxu0 0
  %1386 = vmatpush1.bf16.msra.mxu0 0
  %1387 = vmatprep.subr.bf16.mxu0 0
  %1388 = vmatpush1.bf16.msra.mxu0 0
  %1389 = vmatprep.subr.bf16.mxu0 0
  %1390 = vmatpush1.bf16.msra.mxu0 0
  %1391 = vmatprep.subr.bf16.mxu0 0
  %1392 = vmatpush1.bf16.msra.mxu0 0
  %1393 = vmatprep.subr.bf16.mxu0 0
  %1394 = vmatpush1.bf16.msra.mxu0 0
  %1395 = vmatprep.subr.bf16.mxu0 0
  %1396 = vmatpush1.bf16.msra.mxu0 0
  %1397 = vmatprep.mubr.bf16.mxu0 0
  %1398 = vmatmul.mubr.bf16.gmra.mrb[0].mxu0 %v1360
  %v1399 = vpop.f32.mrb[0].mxu0
  %v1400 = vadd.f32 %v1346, %v1399
  %v1401 = vpop.f32.mrb[0].mxu0
  %v1402 = vpop.f32.mrb[0].mxu0
  %v1403 = vadd.f32 %v1346, %v1402
  %v1404 = vpop.f32.mrb[0].mxu0
  %1405 = vmatprep.mubr.bf16.mxu0 0
  %1406 = vmatmul.mubr.bf16.gmra.mrb[0].mxu0 %v1363
  %v1407 = vpop.f32.mrb[0].mxu0
  %v1408 = vadd.f32 %v1346, %v1407
  %v1409 = vpop.f32.mrb[0].mxu0
  %v1410 = vpop.f32.mrb[0].mxu0
  %v1411 = vadd.f32 %v1346, %v1410
  %v1412 = vpop.f32.mrb[0].mxu0
  %1413 = vdwg.mxu0
  %vm1414 = vcmp.gt.f32.partialorder %v1400, 0.0
  %vm1415 = vcmp.gt.f32.partialorder %v1403, 0.0
  %vm1416 = vcmp.gt.f32.partialorder %v1408, 0.0
  %vm1417 = vcmp.gt.f32.partialorder %v1411, 0.0
  %v1418 = vmul.f32 %v1400, 0.01
  %v1419 = vmul.f32 %v1403, 0.01
  %v1420 = vmul.f32 %v1408, 0.01
  %v1421 = vmul.f32 %v1411, 0.01
  %v1422 = vsel %vm1414, %v1400, %v1418
  %v1423 = vsel %vm1415, %v1403, %v1419
  %v1424 = vsel %vm1416, %v1408, %v1420
  %v1425 = vsel %vm1417, %v1411, %v1421
  %v1426 = vpack.c.bf16 %v1423, %v1422
  %v1427 = vpack.c.bf16 %v1425, %v1424
  %v1428 = vld [vmem:[%s2 + $0x1b8] sm:$0xf]
  %v1429 = vld [vmem:[%s2 + $0x1bc] sm:$0xf]
  %v1430 = vld [vmem:[%s2 + $0x1c0] sm:$0xf]
  %v1431 = vld [vmem:[%s2 + $0x1c4] sm:$0xf]
  %v1432 = vlaneseq
  %v1433 = vshrl.u32 %v1432, 7
  %v1434 = vsub.s32 7, %v1433
  %v1435 = vrot.slane %v18, %v1434
  %v1440 = vunpack.c.l.b16 %v1428
  %v1441 = vunpack.c.l.b16 %v1429
  %v1442 = vunpack.c.l.b16 %v1430
  %v1443 = vunpack.c.l.b16 %v1431
  %v1444 = vpack.c.b16 %v1441, %v1440
  %v1445 = vpack.c.b16 %v1443, %v1442
  %v1449 = vsel %vm562, %v1426, 0
  %v1452 = vsel %vm562, %v1427, 0
  %1454 = vmatprep.subr.bf16.mxu0 0
  %1455 = vmatpush1.bf16.msra.mxu0 %v1444
  %1456 = vmatprep.subr.bf16.mxu0 0
  %1457 = vmatpush1.bf16.msra.mxu0 %v1445
  %1458 = vmatprep.subr.bf16.mxu0 0
  %1459 = vmatpush1.bf16.msra.mxu0 0
  %1460 = vmatprep.subr.bf16.mxu0 0
  %1461 = vmatpush1.bf16.msra.mxu0 0
  %1462 = vmatprep.subr.bf16.mxu0 0
  %1463 = vmatpush1.bf16.msra.mxu0 0
  %1464 = vmatprep.subr.bf16.mxu0 0
  %1465 = vmatpush1.bf16.msra.mxu0 0
  %1466 = vmatprep.subr.bf16.mxu0 0
  %1467 = vmatpush1.bf16.msra.mxu0 0
  %1468 = vmatprep.subr.bf16.mxu0 0
  %1469 = vmatpush1.bf16.msra.mxu0 0
  %1470 = vmatprep.subr.bf16.mxu0 0
  %1471 = vmatpush1.bf16.msra.mxu0 0
  %1472 = vmatprep.subr.bf16.mxu0 0
  %1473 = vmatpush1.bf16.msra.mxu0 0
  %1474 = vmatprep.subr.bf16.mxu0 0
  %1475 = vmatpush1.bf16.msra.mxu0 0
  %1476 = vmatprep.subr.bf16.mxu0 0
  %1477 = vmatpush1.bf16.msra.mxu0 0
  %1478 = vmatprep.subr.bf16.mxu0 0
  %1479 = vmatpush1.bf16.msra.mxu0 0
  %1480 = vmatprep.subr.bf16.mxu0 0
  %1481 = vmatpush1.bf16.msra.mxu0 0
  %1482 = vmatprep.subr.bf16.mxu0 0
  %1483 = vmatpush1.bf16.msra.mxu0 0
  %1484 = vmatprep.subr.bf16.mxu0 0
  %1485 = vmatpush1.bf16.msra.mxu0 0
  %1486 = vmatprep.mubr.bf16.mxu0 0
  %1487 = vmatmul.mubr.bf16.gmra.mrb[0].mxu0 %v1449
  %v1488 = vpop.f32.mrb[0].mxu0
  %v1489 = vadd.f32 %v1435, %v1488
  %v1490 = vpop.f32.mrb[0].mxu0
  %v1491 = vpop.f32.mrb[0].mxu0
  %v1492 = vadd.f32 %v1435, %v1491
  %v1493 = vpop.f32.mrb[0].mxu0
  %1494 = vmatprep.mubr.bf16.mxu0 0
  %1495 = vmatmul.mubr.bf16.gmra.mrb[0].mxu0 %v1452
  %v1496 = vpop.f32.mrb[0].mxu0
  %v1497 = vadd.f32 %v1435, %v1496
  %v1498 = vpop.f32.mrb[0].mxu0
  %v1499 = vpop.f32.mrb[0].mxu0
  %v1500 = vadd.f32 %v1435, %v1499
  %v1501 = vpop.f32.mrb[0].mxu0
  %1502 = vdwg.mxu0
  %1507 = vrot.lane.b32.xlu0 %v1489, 32
  %v1508 = vpop.permute.xlu0 %1507
  %1509 = vrot.lane.b32.xlu0 %v1492, 32
  %v1510 = vpop.permute.xlu0 %1509
  %1511 = vrot.lane.b32.xlu0 %v1497, 32
  %v1512 = vpop.permute.xlu0 %1511
  %1513 = vrot.lane.b32.xlu0 %v1500, 32
  %v1514 = vpop.permute.xlu0 %1513
  %v1519 = vsel %vm562, %v1244, %v1508
  %v1520 = vsel %vm562, %v1245, %v1510
  %v1521 = vsel %vm562, %v1246, %v1512
  %v1522 = vsel %vm562, %v1247, %v1514
  %vm1523 = vcmask 523264
  %v1524 = vsel %vm1523, %v1519, 0.0
  %v1525 = vsel %vm1523, %v1520, 0.0
  %v1526 = vsel %vm1523, %v1521, 0.0
  %v1527 = vsel %vm1523, %v1522, 0.0
  %1528 = vst [vmem:[%s4] sm:$0xff] %v1524
  %1529 = vst [vmem:[%s4 + $0x8] sm:$0xff] %v1525
  %1530 = vst [vmem:[%s4 + $0x10] sm:$0xff] %v1526
  %1531 = vst [vmem:[%s4 + $0x18] sm:$0xff] %v1527
  // Predicated region
  $region18: #{refine_forward.1} parent=0 // pred_check
    _
  $region19: #{refine_forward.1} parent=0 // pred_check_branch
    %1533 = sbr.rel (0) target = $region21
  $region20: #{refine_forward.1} parent=0 // pred_region
    _
  $region21: #{refine_forward.1} parent=0 // pred_fallthru
    _
  // Predicated region
  $region22: #{refine_forward.1} parent=0 // pred_check
    _
  $region23: #{refine_forward.1} parent=0 // pred_check_branch
    %1535 = sbr.rel (0) target = $region25
  $region24: #{refine_forward.1} parent=0 // pred_region
    _
  $region25: #{refine_forward.1} parent=0 // pred_fallthru
    _

</llo_original>
